<compile_context>
chip_gen: v5e
topology: v5e:2x2
jax: 0.10.0
libtpu: 0.0.40
codegen_flags: <defaults>
</compile_context>

<pallas_src>
import functools
import math

import jax
import jax.numpy as jnp
from jax.experimental import pallas as pl
from jax.experimental.pallas import tpu as pltpu

GAMMA = 1.0
EPS = 1e-16

# Deterministic class weights from the module's __init__ (17 classes).
CLASS_WEIGHTS = jnp.array(
    [119.4071, 119.0559, 15.0089, 193.6794, 1.4238, 5.5749, 413.051,
     46.9594, 5.462, 11.0598, 5.0154, 404.79, 9.0415, 1.0791, 3.287,
     121.9247, 19.3772],
    dtype=jnp.float32,
)

_LANES = 128


def _focal_loss_kernel(logits_ref, targets_ref, w_ref, out_ref, acc_ref, *,
                       gamma, eps, scale, total, mult, period_rows,
                       tiles_per_core):
    """Accumulates unweighted focal loss folded to the (period_rows,128) class
    phase; class weights are applied once at finalize."""
    j = pl.program_id(1)                       # reduction (tile) axis, per core

    @pl.when(j == 0)
    def _init():
        acc_ref[...] = jnp.zeros_like(acc_ref)

    period_elems = period_rows * _LANES
    block_elems = mult * period_elems
    tile_idx = pl.program_id(0) * tiles_per_core + j   # logical tile number
    base = tile_idx * block_elems                      # flat element offset

    def slab_loss(s):
        start = pl.multiple_of(s * period_rows, 8)
        x = logits_ref[pl.ds(start, period_rows), :].astype(jnp.float32)
        t = targets_ref[pl.ds(start, period_rows), :].astype(jnp.float32)
        probs = jax.nn.sigmoid(x)                                  # EUP
        pt = jnp.where(t == 1.0, probs, 1.0 - probs)               # torch: targets == 1
        one_minus_pt = 1.0 - pt
        if gamma == 1.0:
            fw = one_minus_pt                 # avoid jnp.power (exp+log on EUP)
        elif gamma == 2.0:
            fw = one_minus_pt * one_minus_pt
        else:
            fw = jnp.power(one_minus_pt, gamma)
        return -(fw * jnp.log(pt + eps))      # (period_rows, 128), unweighted

    # Hot path: every element of this block is in range -> no per-element mask.
    @pl.when(base + block_elems <= total)
    def _accum_full():
        @pl.loop(0, mult)
        def _(s):
            acc_ref[...] += slab_loss(s)

    # Cold path: block overlaps the end of the data (ragged tail, partial last
    # block, or a clamped out-of-range tile) -> mask by global flat index.
    @pl.when(base + block_elems > total)
    def _accum_masked():
        row_ids = jax.lax.broadcasted_iota(jnp.int32, (period_rows, _LANES), 0)
        col_ids = jax.lax.broadcasted_iota(jnp.int32, (period_rows, _LANES), 1)
        in_slab = row_ids * _LANES + col_ids

        @pl.loop(0, mult)
        def _(s):
            flat_idx = base + s * period_elems + in_slab
            acc_ref[...] += jnp.where(flat_idx < total, slab_loss(s), 0.0)

    @pl.when(j == pl.num_programs(1) - 1)
    def _finalize():
        # Single weighted cross-lane reduce + one scalar SMEM store per core.
        out_ref[0, 0] = jnp.sum(acc_ref[...] * w_ref[...]) * scale


def focal_loss(logits, targets, weights=CLASS_WEIGHTS, gamma=GAMMA, eps=EPS,
               reduction="mean", block_mult=64):
    """Pallas TPU implementation of FocalLoss.forward (reduction 'mean'/'sum')."""
    if reduction not in ("mean", "sum"):
        # TODO(synk): reduction='none' (per-element (N, C) loss) is not
        # implemented in this scalar-reduction kernel.
        raise NotImplementedError(f"Reduction {reduction} not implemented.")
    n, c = logits.shape
    assert targets.shape == (n, c)
    assert weights.shape == (c,)
    total = n * c
    # NOTE: flat indices are tracked in int32 (fine for < 2**31 elements).

    # Smallest row count whose (row, lane) -> flat index map has a fixed class
    # phase: period_rows * 128 % c == 0 and period_rows % 8 == 0.  For c=17
    # this is lcm(8, 17) = 136 rows (one 68 KiB weight period).
    c_red = c // math.gcd(c, _LANES)
    period_rows = 8 * c_red // math.gcd(8, c_red)

    rows = -(-total // _LANES)                            # ceil(total / 128)
    mult = max(1, min(int(block_mult), -(-rows // period_rows)))
    tile_rows = period_rows * mult                        # ~4.3 MiB f32 block @ mult=64
    block_elems = tile_rows * _LANES
    num_tiles = -(-rows // tile_rows)

    # Dual-TensorCore split (v7x megacore); a no-op serial loop on v5e/v6e.
    n_split = 2 if num_tiles > 1 else 1
    tiles_per_core = -(-num_tiles // n_split)
    last_tile = num_tiles - 1

    logits_flat = logits.reshape(-1)
    targets_flat = targets.reshape(-1)
    if total % _LANES == 0:
        # Free (bitcast) reshape to a lane-dense slab: no extra HBM pass.
        logits2d = logits_flat.reshape(rows, _LANES)
        targets2d = targets_flat.reshape(rows, _LANES)
    else:
        # TODO(synk): this fallback pads the <128-element tail, which costs one
        # extra read+write pass over the inputs (consider allow_input_fusion).
        pad = rows * _LANES - total
        logits2d = jnp.pad(logits_flat, (0, pad)).reshape(rows, _LANES)
        targets2d = jnp.pad(targets_flat, (0, pad)).reshape(rows, _LANES)

    # One class-weight phase period: W[r, l] = weights[(r*128 + l) % c].
    w_period = jnp.tile(weights.astype(jnp.float32),
                        (period_rows * _LANES) // c).reshape(period_rows, _LANES)

    scale = (1.0 / float(total)) if reduction == "mean" else 1.0
    kernel = functools.partial(
        _focal_loss_kernel, gamma=float(gamma), eps=float(eps), scale=scale,
        total=int(total), mult=int(mult), period_rows=int(period_rows),
        tiles_per_core=int(tiles_per_core))

    def data_map(i, j):
        # Clamp so block origins stay in-bounds; logically-OOB tiles are fully
        # masked inside the kernel (base >= total -> contribute zero).
        return (jnp.minimum(i * tiles_per_core + j, last_tile), 0)

    in_block_bytes = block_elems * (jnp.dtype(logits.dtype).itemsize
                                    + jnp.dtype(targets.dtype).itemsize)
    vmem_limit = min(int(2 * in_block_bytes) + (16 << 20), 56 << 20)

    cost = pl.CostEstimate(
        flops=int(10 * total),
        transcendentals=int(2 * total),
        bytes_accessed=int(logits.size * jnp.dtype(logits.dtype).itemsize
                           + targets.size * jnp.dtype(targets.dtype).itemsize
                           + period_rows * _LANES * 4 + n_split * 4))

    out = pl.pallas_call(
        kernel,
        out_shape=jax.ShapeDtypeStruct((n_split, 1), jnp.float32),
        grid_spec=pltpu.PrefetchScalarGridSpec(
            num_scalar_prefetch=0,
            grid=(n_split, tiles_per_core),
            in_specs=[
                pl.BlockSpec((tile_rows, _LANES), data_map),
                pl.BlockSpec((tile_rows, _LANES), data_map),
                # One 68 KiB weight period, constant index -> DMA'd once.
                pl.BlockSpec((period_rows, _LANES), lambda i, j: (0, 0)),
            ],
            out_specs=pl.BlockSpec((1, 1), lambda i, j: (i, 0),
                                   memory_space=pltpu.MemorySpace.SMEM),
            scratch_shapes=[pltpu.VMEM((period_rows, _LANES), jnp.float32)],
        ),
        compiler_params=pltpu.CompilerParams(
            dimension_semantics=("parallel", "arbitrary"),
            vmem_limit_bytes=vmem_limit),
        cost_estimate=cost,
    )(logits2d, targets2d, w_period)

    # Sum the per-core partials (already scaled).
    return jnp.sum(out)


def focal_loss_ref(logits, targets, weights=CLASS_WEIGHTS, gamma=GAMMA, eps=EPS):
    probs = jax.nn.sigmoid(logits.astype(jnp.float32))
    pt = jnp.where(targets.astype(jnp.float32) == 1.0, probs, 1.0 - probs)
    loss = -jnp.power(1.0 - pt, gamma) * jnp.log(pt + eps)
    loss = loss * weights.astype(jnp.float32).reshape(1, -1)
    return jnp.mean(loss)


if __name__ == "__main__":
    key = jax.random.PRNGKey(0)
    C = 17  # fixed by the 17-element class-weight vector

    def make(n):
        kl, kt = jax.random.split(jax.random.fold_in(key, n))
        logits = jax.random.normal(kl, (n, C), dtype=jnp.float32)
        targets = jax.random.bernoulli(kt, p=0.3, shape=(n, C)).astype(
            jnp.float32)
        return logits, targets

    # 1) lane-aligned fast path (zero-copy reshape), single partial block.
    l1, t1 = make(256)
    o1 = jax.block_until_ready(focal_loss(l1, t1))
    r1 = focal_loss_ref(l1, t1)
    assert jnp.allclose(o1, r1, rtol=1e-4, atol=1e-4), (o1, r1)

    # 2) ragged tail -> fallback pad path with in-kernel masking.
    l2, t2 = make(300)
    o2 = jax.block_until_ready(focal_loss(l2, t2))
    r2 = focal_loss_ref(l2, t2)
    assert jnp.allclose(o2, r2, rtol=1e-4, atol=1e-4), (o2, r2)

    # 3) multi-tile accumulation + dual-core split + clamped OOB tile.
    l3, t3 = make(2560)
    o3 = jax.block_until_ready(focal_loss(l3, t3, block_mult=1))
    r3 = focal_loss_ref(l3, t3)
    assert jnp.allclose(o3, r3, rtol=1e-4, atol=1e-4), (o3, r3)

    print("KERNEL_OK")
</pallas_src>

<mosaic_0001>
module attributes {stable_mosaic.version = 11 : i64} {
  func.func @_focal_loss_kernel(%arg0: i32, %arg1: i32, %arg2: memref<136x128xf32, #tpu.memory_space<vmem>>, %arg3: memref<136x128xf32, #tpu.memory_space<vmem>>, %arg4: memref<136x128xf32, #tpu.memory_space<vmem>>, %arg5: memref<1x1xf32, #tpu.memory_space<smem>>, %arg6: memref<136x128xf32, #tpu.memory_space<vmem>>) attributes {dimension_semantics = [#tpu.dimension_semantics<parallel>, #tpu.dimension_semantics<arbitrary>], iteration_bounds = array<i64: 1, 1>, scalar_prefetch = 0 : i64, scratch_operands = 1 : i64, tpu.core_type = #tpu.core_type<tc>, window_params = [{transform_indices = @transform_0, window_bounds = array<i64: 136, 128>}, {transform_indices = @transform_1, window_bounds = array<i64: 136, 128>}, {pipeline_mode = #tpu.pipeline_mode<synchronous>, transform_indices = @transform_2, window_bounds = array<i64: 136, 128>}, {transform_indices = @transform_3, window_bounds = array<i64: 1, 1>}]} {
    %c0_i32 = arith.constant 0 : i32
    %0 = arith.cmpi eq, %arg1, %c0_i32 : i32
    %1 = arith.extui %0 : i1 to i32
    %c0_i32_0 = arith.constant 0 : i32
    %2 = arith.cmpi ne, %1, %c0_i32_0 : i32
    scf.if %2 {
      %cst = arith.constant 0.000000e+00 : f32
      %17 = vector.broadcast %cst : f32 to vector<136x128xf32>
      %c0 = arith.constant 0 : index
      %c0_8 = arith.constant 0 : index
      %18 = vector.load %arg6[%c0, %c0_8] : memref<136x128xf32, #tpu.memory_space<vmem>>, vector<136x128xf32>
      tpu.vector_store %arg6[%c0, %c0_8], %17 {strides = array<i32>} : memref<136x128xf32, #tpu.memory_space<vmem>>, vector<136x128xf32>,
    } else {
    }
    %c1_i32 = arith.constant 1 : i32
    %3 = arith.muli %arg0, %c1_i32 : i32
    %4 = arith.addi %3, %arg1 : i32
    %c17408_i32 = arith.constant 17408 : i32
    %5 = arith.muli %4, %c17408_i32 : i32
    %c17408_i32_1 = arith.constant 17408 : i32
    %6 = arith.addi %5, %c17408_i32_1 : i32
    %c4352_i32 = arith.constant 4352 : i32
    %7 = arith.cmpi sle, %6, %c4352_i32 : i32
    %8 = arith.extui %7 : i1 to i32
    %c0_i32_2 = arith.constant 0 : i32
    %9 = arith.cmpi ne, %8, %c0_i32_2 : i32
    scf.if %9 {
      %c0_i32_8 = arith.constant 0 : i32
      %c1_i32_9 = arith.constant 1 : i32
      %17 = arith.muli %c0_i32_8, %c1_i32_9 : i32
      %c0_i32_10 = arith.constant 0 : i32
      %18 = arith.addi %c0_i32_10, %17 : i32
      %c0 = arith.constant 0 : index
      %c0_11 = arith.constant 0 : index
      %19 = vector.load %arg6[%c0, %c0_11] : memref<136x128xf32, #tpu.memory_space<vmem>>, vector<136x128xf32>
      %c136_i32 = arith.constant 136 : i32
      %20 = arith.muli %18, %c136_i32 : i32
      %21 = tpu.assume_multiple %20, 8 : i32
      %22 = arith.index_cast %21 : i32 to index
      %c0_12 = arith.constant 0 : index
      %23 = vector.load %arg2[%22, %c0_12] : memref<136x128xf32, #tpu.memory_space<vmem>>, vector<136x128xf32>
      %24 = arith.index_cast %21 : i32 to index
      %c0_13 = arith.constant 0 : index
      %25 = vector.load %arg3[%24, %c0_13] : memref<136x128xf32, #tpu.memory_space<vmem>>, vector<136x128xf32>
      %26 = arith.negf %23 : vector<136x128xf32>
      %27 = math.exp %26 : vector<136x128xf32>
      %cst = arith.constant 1.000000e+00 : f32
      %28 = vector.broadcast %cst : f32 to vector<136x128xf32>
      %29 = arith.addf %28, %27 : vector<136x128xf32>
      %30 = arith.divf %28, %29 : vector<136x128xf32>
      %cst_14 = arith.constant 1.000000e+00 : f32
      %31 = vector.broadcast %cst_14 : f32 to vector<136x128xf32>
      %32 = arith.cmpf oeq, %25, %31 : vector<136x128xf32>
      %cst_15 = arith.constant 1.000000e+00 : f32
      %33 = vector.broadcast %cst_15 : f32 to vector<136x128xf32>
      %34 = arith.subf %33, %30 : vector<136x128xf32>
      %35 = arith.select %32, %30, %34 : vector<136x128xi1>, vector<136x128xf32>
      %cst_16 = arith.constant 1.000000e+00 : f32
      %36 = vector.broadcast %cst_16 : f32 to vector<136x128xf32>
      %37 = arith.subf %36, %35 : vector<136x128xf32>
      %cst_17 = arith.constant 1.000000e-16 : f32
      %38 = vector.broadcast %cst_17 : f32 to vector<136x128xf32>
      %39 = arith.addf %35, %38 : vector<136x128xf32>
      %40 = math.log %39 : vector<136x128xf32>
      %41 = arith.mulf %37, %40 : vector<136x128xf32>
      %cst_18 = arith.constant 0.000000e+00 : f32
      %42 = vector.broadcast %cst_18 : f32 to vector<136x128xf32>
      %43 = arith.subf %42, %41 : vector<136x128xf32>
      %44 = arith.addf %19, %43 : vector<136x128xf32>
      %c0_19 = arith.constant 0 : index
      %c0_20 = arith.constant 0 : index
      %45 = vector.load %arg6[%c0_19, %c0_20] : memref<136x128xf32, #tpu.memory_space<vmem>>, vector<136x128xf32>
      tpu.vector_store %arg6[%c0_19, %c0_20], %44 {strides = array<i32>} : memref<136x128xf32, #tpu.memory_space<vmem>>, vector<136x128xf32>,
      %c1_i32_21 = arith.constant 1 : i32
    } else {
    }
    %c17408_i32_3 = arith.constant 17408 : i32
    %10 = arith.addi %5, %c17408_i32_3 : i32
    %c4352_i32_4 = arith.constant 4352 : i32
    %11 = arith.cmpi sgt, %10, %c4352_i32_4 : i32
    %12 = arith.extui %11 : i1 to i32
    %c0_i32_5 = arith.constant 0 : i32
    %13 = arith.cmpi ne, %12, %c0_i32_5 : i32
    scf.if %13 {
      %17 = tpu.iota {dimensions = array<i32: 0>} : vector<136x128xi32>
      %18 = tpu.iota {dimensions = array<i32: 1>} : vector<136x128xi32>
      %c128_i32 = arith.constant 128 : i32
      %19 = vector.broadcast %c128_i32 : i32 to vector<136x128xi32>
      %20 = arith.muli %17, %19 : vector<136x128xi32>
      %21 = arith.addi %20, %18 : vector<136x128xi32>
      %c0_i32_8 = arith.constant 0 : i32
      %c1_i32_9 = arith.constant 1 : i32
      %22 = arith.muli %c0_i32_8, %c1_i32_9 : i32
      %c0_i32_10 = arith.constant 0 : i32
      %23 = arith.addi %c0_i32_10, %22 : i32
      %c17408_i32_11 = arith.constant 17408 : i32
      %24 = arith.muli %23, %c17408_i32_11 : i32
      %25 = arith.addi %5, %24 : i32
      %26 = vector.broadcast %25 : i32 to vector<136x128xi32>
      %27 = arith.addi %26, %21 : vector<136x128xi32>
      %c0 = arith.constant 0 : index
      %c0_12 = arith.constant 0 : index
      %28 = vector.load %arg6[%c0, %c0_12] : memref<136x128xf32, #tpu.memory_space<vmem>>, vector<136x128xf32>
      %c4352_i32_13 = arith.constant 4352 : i32
      %29 = vector.broadcast %c4352_i32_13 : i32 to vector<136x128xi32>
      %30 = arith.cmpi slt, %27, %29 : vector<136x128xi32>
      %c136_i32 = arith.constant 136 : i32
      %31 = arith.muli %23, %c136_i32 : i32
      %32 = tpu.assume_multiple %31, 8 : i32
      %33 = arith.index_cast %32 : i32 to index
      %c0_14 = arith.constant 0 : index
      %34 = vector.load %arg2[%33, %c0_14] : memref<136x128xf32, #tpu.memory_space<vmem>>, vector<136x128xf32>
      %35 = arith.index_cast %32 : i32 to index
      %c0_15 = arith.constant 0 : index
      %36 = vector.load %arg3[%35, %c0_15] : memref<136x128xf32, #tpu.memory_space<vmem>>, vector<136x128xf32>
      %37 = arith.negf %34 : vector<136x128xf32>
      %38 = math.exp %37 : vector<136x128xf32>
      %cst = arith.constant 1.000000e+00 : f32
      %39 = vector.broadcast %cst : f32 to vector<136x128xf32>
      %40 = arith.addf %39, %38 : vector<136x128xf32>
      %41 = arith.divf %39, %40 : vector<136x128xf32>
      %cst_16 = arith.constant 1.000000e+00 : f32
      %42 = vector.broadcast %cst_16 : f32 to vector<136x128xf32>
      %43 = arith.cmpf oeq, %36, %42 : vector<136x128xf32>
      %cst_17 = arith.constant 1.000000e+00 : f32
      %44 = vector.broadcast %cst_17 : f32 to vector<136x128xf32>
      %45 = arith.subf %44, %41 : vector<136x128xf32>
      %46 = arith.select %43, %41, %45 : vector<136x128xi1>, vector<136x128xf32>
      %cst_18 = arith.constant 1.000000e+00 : f32
      %47 = vector.broadcast %cst_18 : f32 to vector<136x128xf32>
      %48 = arith.subf %47, %46 : vector<136x128xf32>
      %cst_19 = arith.constant 1.000000e-16 : f32
      %49 = vector.broadcast %cst_19 : f32 to vector<136x128xf32>
      %50 = arith.addf %46, %49 : vector<136x128xf32>
      %51 = math.log %50 : vector<136x128xf32>
      %52 = arith.mulf %48, %51 : vector<136x128xf32>
      %cst_20 = arith.constant 0.000000e+00 : f32
      %53 = vector.broadcast %cst_20 : f32 to vector<136x128xf32>
      %54 = arith.subf %53, %52 : vector<136x128xf32>
      %cst_21 = arith.constant 0.000000e+00 : f32
      %55 = vector.broadcast %cst_21 : f32 to vector<136x128xf32>
      %56 = arith.select %30, %54, %55 : vector<136x128xi1>, vector<136x128xf32>
      %57 = arith.addf %28, %56 : vector<136x128xf32>
      %c0_22 = arith.constant 0 : index
      %c0_23 = arith.constant 0 : index
      %58 = vector.load %arg6[%c0_22, %c0_23] : memref<136x128xf32, #tpu.memory_space<vmem>>, vector<136x128xf32>
      tpu.vector_store %arg6[%c0_22, %c0_23], %57 {strides = array<i32>} : memref<136x128xf32, #tpu.memory_space<vmem>>, vector<136x128xf32>,
      %c1_i32_24 = arith.constant 1 : i32
    } else {
    }
    %c0_i32_6 = arith.constant 0 : i32
    %14 = arith.cmpi eq, %arg1, %c0_i32_6 : i32
    %15 = arith.extui %14 : i1 to i32
    %c0_i32_7 = arith.constant 0 : i32
    %16 = arith.cmpi ne, %15, %c0_i32_7 : i32
    scf.if %16 {
      %c0 = arith.constant 0 : index
      %c0_8 = arith.constant 0 : index
      %17 = vector.load %arg6[%c0, %c0_8] : memref<136x128xf32, #tpu.memory_space<vmem>>, vector<136x128xf32>
      %c0_9 = arith.constant 0 : index
      %c0_10 = arith.constant 0 : index
      %18 = vector.load %arg4[%c0_9, %c0_10] : memref<136x128xf32, #tpu.memory_space<vmem>>, vector<136x128xf32>
      %19 = arith.mulf %17, %18 : vector<136x128xf32>
      %20 = vector.shape_cast %19 : vector<136x128xf32> to vector<1x136x128xf32>
      %cst = arith.constant dense<0.000000e+00> : vector<1xf32>
      %21 = vector.multi_reduction <add>, %20, %cst [1, 2] : vector<1x136x128xf32> to vector<1xf32>
      %22 = vector.shape_cast %21 : vector<1xf32> to vector<1x1x1xf32>
      %23 = vector.extract %22[0, 0, 0] : f32 from vector<1x1x1xf32>
      %cst_11 = arith.constant 2.29779413E-4 : f32
      %24 = arith.mulf %23, %cst_11 : f32
      %c0_12 = arith.constant 0 : index
      %c0_13 = arith.constant 0 : index
      %25 = memref.load %arg5[%c0_12, %c0_13] : memref<1x1xf32, #tpu.memory_space<smem>>
      memref.store %24, %arg5[%c0_12, %c0_13] : memref<1x1xf32, #tpu.memory_space<smem>>
    } else {
    }
    return
  }
  func.func @transform_0(%arg0: i32, %arg1: i32) -> (i32, i32) {
    %c1_i32 = arith.constant 1 : i32
    %0 = arith.muli %arg0, %c1_i32 : i32
    %1 = arith.addi %0, %arg1 : i32
    %c0_i32 = arith.constant 0 : i32
    %2 = arith.minsi %1, %c0_i32 : i32
    %c0_i32_0 = arith.constant 0 : i32
    %c0_i32_1 = arith.constant 0 : i32
    return %2, %c0_i32_0 : i32, i32
  }
  func.func @transform_1(%arg0: i32, %arg1: i32) -> (i32, i32) {
    %c1_i32 = arith.constant 1 : i32
    %0 = arith.muli %arg0, %c1_i32 : i32
    %1 = arith.addi %0, %arg1 : i32
    %c0_i32 = arith.constant 0 : i32
    %2 = arith.minsi %1, %c0_i32 : i32
    %c0_i32_0 = arith.constant 0 : i32
    %c0_i32_1 = arith.constant 0 : i32
    return %2, %c0_i32_0 : i32, i32
  }
  func.func @transform_2(%arg0: i32, %arg1: i32) -> (i32, i32) {
    %c0_i32 = arith.constant 0 : i32
    %c0_i32_0 = arith.constant 0 : i32
    %c0_i32_1 = arith.constant 0 : i32
    return %c0_i32, %c0_i32_0 : i32, i32
  }
  func.func @transform_3(%arg0: i32, %arg1: i32) -> (i32, i32) {
    %c0_i32 = arith.constant 0 : i32
    %c0_i32_0 = arith.constant 0 : i32
    return %arg0, %c0_i32 : i32, i32
  }
}

</mosaic_0001>

<llo_original>
// kernel: tpu_custom_call.1
$region0: #{tpu_custom_call.1}
  #allocation0 [shape = 'u32[]', space=smem, size = 0x4, offset = 0x4, fixed_abs, tag = 'smem constant byte address 0x4 - core index']
  #allocation1 [shape = 'u32[72,128]{1,0:T(1,128)}', space=vmem, size = 0x9000, scoped, tag = 'internal scratch']
  #allocation2 [shape = 'f32[136,128]{1,0:T(8,128)}', space=vmem, size = 0x11000, scoped, tag = 'scratch operand']
  %s0 = inlined_call_operand.hbm [shape: f32[34,128], index: 0, kind: input, shape index: {}]
  %s1 = inlined_call_operand.hbm [shape: f32[34,128], index: 1, kind: input, shape index: {}]
  %s2 = inlined_call_operand.hbm [shape: f32[136,128], index: 2, kind: input, shape index: {}]
  %s3 = inlined_call_operand.hbm [shape: f32[1,1], index: 3, kind: output, shape index: {}]
  %s4 = sld [smem:[#allocation0]]
  $region50: #{tpu_custom_call.1} parent=0
    _
  %s6 = ssub.s32 1, %s4
  %s7 = scalar_select 0, %s6, %s4
  $region1: #{tpu_custom_call.1} parent=0
    #allocation3 [shape = 'u8[69632]{0}', space=vmem, size = 0x11000, scoped, tag = 'input window, operand 0, single buffered']
    #allocation4 [shape = 's32[1]{0}', space=sflag, size = 0x4, scoped, tag = 'scoped memory for tpu_custom_call.1']
    #allocation5 [shape = 's32[1]{0}', space=sflag, size = 0x4, scoped, tag = 'scoped memory for tpu_custom_call.1']
    #allocation6 [shape = 'u8[69632]{0}', space=vmem, size = 0x11000, scoped, tag = 'input window, operand 1, single buffered']
    #allocation7 [shape = 's32[1]{0}', space=sflag, size = 0x4, scoped, tag = 'scoped memory for tpu_custom_call.1']
    #allocation8 [shape = 'u8[69632]{0}', space=vmem, size = 0x11000, scoped, tag = 'input window, operand 2, single buffered']
    #allocation9 [shape = 'u8[512]{0}', space=smem, size = 0x200, scoped, tag = 'output window, operand 0, single buffered']
    %8 = vsyncpa [#allocation4], 0
    %9 = vsyncpa [#allocation7], 0
    %10 = vsyncpa [#allocation5], 0
    // Predicated region
    $region2: #{tpu_custom_call.1} parent=1 // pred_check
      _
    $region3: #{tpu_custom_call.1} parent=1 // pred_check_branch
      %12 = sbr.rel (0) target = $region5
    $region4: #{tpu_custom_call.1} parent=1 // pred_region
      %s13 = sadd.s32 0, 0
      %p14 = scmp.lt.s32.totalorder %s13, 0
      %s15 = scalar_select %p14, %s13, 0
      %s16 = smul.u32 17, %s15
      %s17 = ssub.s32 5, %s16
      %s18 = smul.u32 8, %s17
      %s19 = ssub.s32 136, %s18
      %s20 = sshll.u32 %s19, 4
      %21 = vsyncadd [#allocation4], %s20
      %p22 = scmp.ne.s32.totalorder 0, %s18
      %s23 = smul.addr %s16, 8
      %s24 = scalar_lea.hbm %s0, %s23
      %s25 = smul.u32 8, %s17
      %s26 = sshll.u32 %s24, 4
      %s27 = int_to_ptr.hbm [resolvable:$true] %s26
      %s28 = sshll.u32 [#allocation3], 4
      %s29 = int_to_ptr.vmem [resolvable:$true] %s28
      %s30 = sshll.u32 %s25, 4
      %34 = dma.hbm_to_vmem [thread:$0]  (%p22), %s27, %s30, %s29, [#allocation4], 128, 128, 8
    $region5: #{tpu_custom_call.1} parent=1 // pred_fallthru
      _
    // Predicated region
    $region6: #{tpu_custom_call.1} parent=1 // pred_check
      _
    $region7: #{tpu_custom_call.1} parent=1 // pred_check_branch
      %36 = sbr.rel (0) target = $region9
    $region8: #{tpu_custom_call.1} parent=1 // pred_region
      %s37 = sadd.s32 0, 0
      %p38 = scmp.lt.s32.totalorder %s37, 0
      %s39 = scalar_select %p38, %s37, 0
      %s40 = smul.u32 17, %s39
      %s41 = ssub.s32 5, %s40
      %s42 = smul.u32 8, %s41
      %s43 = ssub.s32 136, %s42
      %s44 = sshll.u32 %s43, 4
      %45 = vsyncadd [#allocation7], %s44
      %p46 = scmp.ne.s32.totalorder 0, %s42
      %s47 = smul.addr %s40, 8
      %s48 = scalar_lea.hbm %s1, %s47
      %s49 = smul.u32 8, %s41
      %s50 = sshll.u32 %s48, 4
      %s51 = int_to_ptr.hbm [resolvable:$true] %s50
      %s52 = sshll.u32 [#allocation6], 4
      %s53 = int_to_ptr.vmem [resolvable:$true] %s52
      %s54 = sshll.u32 %s49, 4
      %58 = dma.hbm_to_vmem [thread:$0]  (%p46), %s51, %s54, %s53, [#allocation7], 128, 128, 8
    $region9: #{tpu_custom_call.1} parent=1 // pred_fallthru
      _
    // Predicated region
    $region10: #{tpu_custom_call.1} parent=1 // pred_check
      _
    $region11: #{tpu_custom_call.1} parent=1 // pred_check_branch
      %60 = sbr.rel (0) target = $region13
    $region12: #{tpu_custom_call.1} parent=1 // pred_region
      %62 = vsyncadd [#allocation7], 0
      %s63 = sshll.u32 %s2, 4
      %s64 = int_to_ptr.hbm [resolvable:$true] %s63
      %s65 = sshll.u32 [#allocation8], 4
      %s66 = int_to_ptr.vmem [resolvable:$true] %s65
      %71 = dma.hbm_to_vmem [thread:$0]  %s64, 2176, %s66, [#allocation7], 128, 128, 8
    $region13: #{tpu_custom_call.1} parent=1 // pred_fallthru
      _
    // Predicated region
    $region14: #{tpu_custom_call.1} parent=1 // pred_check
      _
    $region15: #{tpu_custom_call.1} parent=1 // pred_check_branch
      %73 = sbr.rel (0) target = $region17
    $region16: #{tpu_custom_call.1} parent=1 // pred_region
      %75 = dma.done [#allocation4], 2176
    $region17: #{tpu_custom_call.1} parent=1 // pred_fallthru
      _
    // Predicated region
    $region18: #{tpu_custom_call.1} parent=1 // pred_check
      _
    $region19: #{tpu_custom_call.1} parent=1 // pred_check_branch
      %77 = sbr.rel (0) target = $region21
    $region20: #{tpu_custom_call.1} parent=1 // pred_region
      %79 = dma.done [#allocation7], 2176
    $region21: #{tpu_custom_call.1} parent=1 // pred_fallthru
      _
    // Predicated region
    $region22: #{tpu_custom_call.1} parent=1 // pred_check
      _
    $region23: #{tpu_custom_call.1} parent=1 // pred_check_branch
      %81 = sbr.rel (0) target = $region25
    $region24: #{tpu_custom_call.1} parent=1 // pred_region
      %83 = dma.done [#allocation7], 2176
    $region25: #{tpu_custom_call.1} parent=1 // pred_fallthru
      _
    %s84 = sadd.s32 0, 0
    %p85 = scmp.lt.s32.totalorder %s84, 0
    %s86 = scalar_select %p85, %s84, 0
    %s87 = smul.u32 17, %s86
    %s88 = ssub.s32 5, %s87
    %s89 = smul.u32 8, %s88
    %s90 = sadd.s32 0, 0
    %p91 = scmp.lt.s32.totalorder %s90, 0
    %s92 = scalar_select %p91, %s90, 0
    %s93 = smul.u32 17, %s92
    %s94 = ssub.s32 5, %s93
    %s95 = smul.u32 8, %s94
    %p96 = scmp.eq.s32.totalorder 0, 0
    // Predicated region
    $region26: #{tpu_custom_call.1} parent=1 // pred_check
      %p97 = pneg %p96
    $region27: #{tpu_custom_call.1} parent=1 // pred_check_branch
      %99 = sbr.rel (%p97) target = $region29
    $region28: #{tpu_custom_call.1} parent=1 // pred_region
      %100 = vst [vmem:[#allocation2] sm:$0xff] 0.0
      %101 = vst [vmem:[#allocation2 + $0x8] sm:$0xff] 0.0
      %102 = vst [vmem:[#allocation2 + $0x10] sm:$0xff] 0.0
      %103 = vst [vmem:[#allocation2 + $0x18] sm:$0xff] 0.0
      %104 = vst [vmem:[#allocation2 + $0x20] sm:$0xff] 0.0
      %105 = vst [vmem:[#allocation2 + $0x28] sm:$0xff] 0.0
      %106 = vst [vmem:[#allocation2 + $0x30] sm:$0xff] 0.0
      %107 = vst [vmem:[#allocation2 + $0x38] sm:$0xff] 0.0
      %108 = vst [vmem:[#allocation2 + $0x40] sm:$0xff] 0.0
      %109 = vst [vmem:[#allocation2 + $0x48] sm:$0xff] 0.0
      %110 = vst [vmem:[#allocation2 + $0x50] sm:$0xff] 0.0
      %111 = vst [vmem:[#allocation2 + $0x58] sm:$0xff] 0.0
      %112 = vst [vmem:[#allocation2 + $0x60] sm:$0xff] 0.0
      %113 = vst [vmem:[#allocation2 + $0x68] sm:$0xff] 0.0
      %114 = vst [vmem:[#allocation2 + $0x70] sm:$0xff] 0.0
      %115 = vst [vmem:[#allocation2 + $0x78] sm:$0xff] 0.0
      %116 = vst [vmem:[#allocation2 + $0x80] sm:$0xff] 0.0
    $region29: #{tpu_custom_call.1} parent=1 // pred_fallthru
      _
    %s117 = sadd.s32 0, 0
    %s118 = smul.u32 %s117, 17408
    %s119 = sadd.s32 %s118, 17408
    %p120 = scmp.le.s32.totalorder %s119, 4352
    // Predicated region
    $region30: #{tpu_custom_call.1} parent=1 // pred_check
      %p121 = pneg %p120
    $region31: #{tpu_custom_call.1} parent=1 // pred_check_branch
      %123 = sbr.rel (%p121) target = $region33
    $region32: #{tpu_custom_call.1} parent=1 // pred_region
      %v124 = vld [vmem:[#allocation2] sm:$0xff]
      %v125 = vld [vmem:[#allocation2 + $0x8] sm:$0xff]
      %v126 = vld [vmem:[#allocation2 + $0x10] sm:$0xff]
      %v127 = vld [vmem:[#allocation2 + $0x18] sm:$0xff]
      %v128 = vld [vmem:[#allocation2 + $0x20] sm:$0xff]
      %v129 = vld [vmem:[#allocation2 + $0x28] sm:$0xff]
      %v130 = vld [vmem:[#allocation2 + $0x30] sm:$0xff]
      %v131 = vld [vmem:[#allocation2 + $0x38] sm:$0xff]
      %v132 = vld [vmem:[#allocation2 + $0x40] sm:$0xff]
      %v133 = vld [vmem:[#allocation2 + $0x48] sm:$0xff]
      %v134 = vld [vmem:[#allocation2 + $0x50] sm:$0xff]
      %v135 = vld [vmem:[#allocation2 + $0x58] sm:$0xff]
      %v136 = vld [vmem:[#allocation2 + $0x60] sm:$0xff]
      %v137 = vld [vmem:[#allocation2 + $0x68] sm:$0xff]
      %v138 = vld [vmem:[#allocation2 + $0x70] sm:$0xff]
      %v139 = vld [vmem:[#allocation2 + $0x78] sm:$0xff]
      %v140 = vld [vmem:[#allocation2 + $0x80] sm:$0xff]
      %v141 = vld [vmem:[#allocation3] sm:$0xff]
      %v142 = vld [vmem:[#allocation3 + $0x8] sm:$0xff]
      %v143 = vld [vmem:[#allocation3 + $0x10] sm:$0xff]
      %v144 = vld [vmem:[#allocation3 + $0x18] sm:$0xff]
      %v145 = vld [vmem:[#allocation3 + $0x20] sm:$0xff]
      %v146 = vld [vmem:[#allocation3 + $0x28] sm:$0xff]
      %v147 = vld [vmem:[#allocation3 + $0x30] sm:$0xff]
      %v148 = vld [vmem:[#allocation3 + $0x38] sm:$0xff]
      %v149 = vld [vmem:[#allocation3 + $0x40] sm:$0xff]
      %v150 = vld [vmem:[#allocation3 + $0x48] sm:$0xff]
      %v151 = vld [vmem:[#allocation3 + $0x50] sm:$0xff]
      %v152 = vld [vmem:[#allocation3 + $0x58] sm:$0xff]
      %v153 = vld [vmem:[#allocation3 + $0x60] sm:$0xff]
      %v154 = vld [vmem:[#allocation3 + $0x68] sm:$0xff]
      %v155 = vld [vmem:[#allocation3 + $0x70] sm:$0xff]
      %v156 = vld [vmem:[#allocation3 + $0x78] sm:$0xff]
      %v157 = vld [vmem:[#allocation3 + $0x80] sm:$0xff]
      %v158 = vld [vmem:[#allocation6] sm:$0xff]
      %v159 = vld [vmem:[#allocation6 + $0x8] sm:$0xff]
      %v160 = vld [vmem:[#allocation6 + $0x10] sm:$0xff]
      %v161 = vld [vmem:[#allocation6 + $0x18] sm:$0xff]
      %v162 = vld [vmem:[#allocation6 + $0x20] sm:$0xff]
      %v163 = vld [vmem:[#allocation6 + $0x28] sm:$0xff]
      %v164 = vld [vmem:[#allocation6 + $0x30] sm:$0xff]
      %v165 = vld [vmem:[#allocation6 + $0x38] sm:$0xff]
      %v166 = vld [vmem:[#allocation6 + $0x40] sm:$0xff]
      %v167 = vld [vmem:[#allocation6 + $0x48] sm:$0xff]
      %v168 = vld [vmem:[#allocation6 + $0x50] sm:$0xff]
      %v169 = vld [vmem:[#allocation6 + $0x58] sm:$0xff]
      %v170 = vld [vmem:[#allocation6 + $0x60] sm:$0xff]
      %v171 = vld [vmem:[#allocation6 + $0x68] sm:$0xff]
      %v172 = vld [vmem:[#allocation6 + $0x70] sm:$0xff]
      %v173 = vld [vmem:[#allocation6 + $0x78] sm:$0xff]
      %v174 = vld [vmem:[#allocation6 + $0x80] sm:$0xff]
      %v175 = vxor.u32 %v141, 2147483648
      %v176 = vxor.u32 %v142, 2147483648
      %v177 = vxor.u32 %v143, 2147483648
      %v178 = vxor.u32 %v144, 2147483648
      %v179 = vxor.u32 %v145, 2147483648
      %v180 = vxor.u32 %v146, 2147483648
      %v181 = vxor.u32 %v147, 2147483648
      %v182 = vxor.u32 %v148, 2147483648
      %v183 = vxor.u32 %v149, 2147483648
      %v184 = vxor.u32 %v150, 2147483648
      %v185 = vxor.u32 %v151, 2147483648
      %v186 = vxor.u32 %v152, 2147483648
      %v187 = vxor.u32 %v153, 2147483648
      %v188 = vxor.u32 %v154, 2147483648
      %v189 = vxor.u32 %v155, 2147483648
      %v190 = vxor.u32 %v156, 2147483648
      %v191 = vxor.u32 %v157, 2147483648
      %v192 = vmul.f32 %v175, 1.442695
      %v193 = vpow.pop %v192
      %v194 = vmul.f32 %v176, 1.442695
      %v195 = vpow.pop %v194
      %v196 = vmul.f32 %v177, 1.442695
      %v197 = vpow.pop %v196
      %v198 = vmul.f32 %v178, 1.442695
      %v199 = vpow.pop %v198
      %v200 = vmul.f32 %v179, 1.442695
      %v201 = vpow.pop %v200
      %v202 = vmul.f32 %v180, 1.442695
      %v203 = vpow.pop %v202
      %v204 = vmul.f32 %v181, 1.442695
      %v205 = vpow.pop %v204
      %v206 = vmul.f32 %v182, 1.442695
      %v207 = vpow.pop %v206
      %v208 = vmul.f32 %v183, 1.442695
      %v209 = vpow.pop %v208
      %v210 = vmul.f32 %v184, 1.442695
      %v211 = vpow.pop %v210
      %v212 = vmul.f32 %v185, 1.442695
      %v213 = vpow.pop %v212
      %v214 = vmul.f32 %v186, 1.442695
      %v215 = vpow.pop %v214
      %v216 = vmul.f32 %v187, 1.442695
      %v217 = vpow.pop %v216
      %v218 = vmul.f32 %v188, 1.442695
      %v219 = vpow.pop %v218
      %v220 = vmul.f32 %v189, 1.442695
      %v221 = vpow.pop %v220
      %v222 = vmul.f32 %v190, 1.442695
      %v223 = vpow.pop %v222
      %v224 = vmul.f32 %v191, 1.442695
      %v225 = vpow.pop %v224
      %v226 = vadd.f32 %v193, 1.0
      %v227 = vadd.f32 %v195, 1.0
      %v228 = vadd.f32 %v197, 1.0
      %v229 = vadd.f32 %v199, 1.0
      %v230 = vadd.f32 %v201, 1.0
      %v231 = vadd.f32 %v203, 1.0
      %v232 = vadd.f32 %v205, 1.0
      %v233 = vadd.f32 %v207, 1.0
      %v234 = vadd.f32 %v209, 1.0
      %v235 = vadd.f32 %v211, 1.0
      %v236 = vadd.f32 %v213, 1.0
      %v237 = vadd.f32 %v215, 1.0
      %v238 = vadd.f32 %v217, 1.0
      %v239 = vadd.f32 %v219, 1.0
      %v240 = vadd.f32 %v221, 1.0
      %v241 = vadd.f32 %v223, 1.0
      %v242 = vadd.f32 %v225, 1.0
      %v243 = vrcp.pop %v226
      %v244 = vmul.f32 %v226, %v243
      %v245 = vsub.f32 1.0, %v244
      %v246 = vmul.f32 %v243, %v245
      %v247 = vadd.f32 %v243, %v246
      %vm248 = vweird.f32 %v226
      %vm249 = vweird.f32 %v243
      %vm250 = vmor %vm248, %vm249
      %v251 = vsel %vm250, %v243, %v247
      %v252 = vand.u32 2147483647, %v226
      %vm253 = vcmp.eq.f32.partialorder %v252, 8.507059e+37
      %v254 = vand.u32 %v226, 2147483648
      %v255 = vor.u32 1.1754944e-38, %v254
      %v256 = vsel %vm253, %v255, %v251
      %v257 = vmul.f32 1.0, %v256
      %v258 = vrcp.pop %v227
      %v259 = vmul.f32 %v227, %v258
      %v260 = vsub.f32 1.0, %v259
      %v261 = vmul.f32 %v258, %v260
      %v262 = vadd.f32 %v258, %v261
      %vm263 = vweird.f32 %v227
      %vm264 = vweird.f32 %v258
      %vm265 = vmor %vm263, %vm264
      %v266 = vsel %vm265, %v258, %v262
      %v267 = vand.u32 2147483647, %v227
      %vm268 = vcmp.eq.f32.partialorder %v267, 8.507059e+37
      %v269 = vand.u32 %v227, 2147483648
      %v270 = vor.u32 1.1754944e-38, %v269
      %v271 = vsel %vm268, %v270, %v266
      %v272 = vmul.f32 1.0, %v271
      %v273 = vrcp.pop %v228
      %v274 = vmul.f32 %v228, %v273
      %v275 = vsub.f32 1.0, %v274
      %v276 = vmul.f32 %v273, %v275
      %v277 = vadd.f32 %v273, %v276
      %vm278 = vweird.f32 %v228
      %vm279 = vweird.f32 %v273
      %vm280 = vmor %vm278, %vm279
      %v281 = vsel %vm280, %v273, %v277
      %v282 = vand.u32 2147483647, %v228
      %vm283 = vcmp.eq.f32.partialorder %v282, 8.507059e+37
      %v284 = vand.u32 %v228, 2147483648
      %v285 = vor.u32 1.1754944e-38, %v284
      %v286 = vsel %vm283, %v285, %v281
      %v287 = vmul.f32 1.0, %v286
      %v288 = vrcp.pop %v229
      %v289 = vmul.f32 %v229, %v288
      %v290 = vsub.f32 1.0, %v289
      %v291 = vmul.f32 %v288, %v290
      %v292 = vadd.f32 %v288, %v291
      %vm293 = vweird.f32 %v229
      %vm294 = vweird.f32 %v288
      %vm295 = vmor %vm293, %vm294
      %v296 = vsel %vm295, %v288, %v292
      %v297 = vand.u32 2147483647, %v229
      %vm298 = vcmp.eq.f32.partialorder %v297, 8.507059e+37
      %v299 = vand.u32 %v229, 2147483648
      %v300 = vor.u32 1.1754944e-38, %v299
      %v301 = vsel %vm298, %v300, %v296
      %v302 = vmul.f32 1.0, %v301
      %v303 = vrcp.pop %v230
      %v304 = vmul.f32 %v230, %v303
      %v305 = vsub.f32 1.0, %v304
      %v306 = vmul.f32 %v303, %v305
      %v307 = vadd.f32 %v303, %v306
      %vm308 = vweird.f32 %v230
      %vm309 = vweird.f32 %v303
      %vm310 = vmor %vm308, %vm309
      %v311 = vsel %vm310, %v303, %v307
      %v312 = vand.u32 2147483647, %v230
      %vm313 = vcmp.eq.f32.partialorder %v312, 8.507059e+37
      %v314 = vand.u32 %v230, 2147483648
      %v315 = vor.u32 1.1754944e-38, %v314
      %v316 = vsel %vm313, %v315, %v311
      %v317 = vmul.f32 1.0, %v316
      %v318 = vrcp.pop %v231
      %v319 = vmul.f32 %v231, %v318
      %v320 = vsub.f32 1.0, %v319
      %v321 = vmul.f32 %v318, %v320
      %v322 = vadd.f32 %v318, %v321
      %vm323 = vweird.f32 %v231
      %vm324 = vweird.f32 %v318
      %vm325 = vmor %vm323, %vm324
      %v326 = vsel %vm325, %v318, %v322
      %v327 = vand.u32 2147483647, %v231
      %vm328 = vcmp.eq.f32.partialorder %v327, 8.507059e+37
      %v329 = vand.u32 %v231, 2147483648
      %v330 = vor.u32 1.1754944e-38, %v329
      %v331 = vsel %vm328, %v330, %v326
      %v332 = vmul.f32 1.0, %v331
      %v333 = vrcp.pop %v232
      %v334 = vmul.f32 %v232, %v333
      %v335 = vsub.f32 1.0, %v334
      %v336 = vmul.f32 %v333, %v335
      %v337 = vadd.f32 %v333, %v336
      %vm338 = vweird.f32 %v232
      %vm339 = vweird.f32 %v333
      %vm340 = vmor %vm338, %vm339
      %v341 = vsel %vm340, %v333, %v337
      %v342 = vand.u32 2147483647, %v232
      %vm343 = vcmp.eq.f32.partialorder %v342, 8.507059e+37
      %v344 = vand.u32 %v232, 2147483648
      %v345 = vor.u32 1.1754944e-38, %v344
      %v346 = vsel %vm343, %v345, %v341
      %v347 = vmul.f32 1.0, %v346
      %v348 = vrcp.pop %v233
      %v349 = vmul.f32 %v233, %v348
      %v350 = vsub.f32 1.0, %v349
      %v351 = vmul.f32 %v348, %v350
      %v352 = vadd.f32 %v348, %v351
      %vm353 = vweird.f32 %v233
      %vm354 = vweird.f32 %v348
      %vm355 = vmor %vm353, %vm354
      %v356 = vsel %vm355, %v348, %v352
      %v357 = vand.u32 2147483647, %v233
      %vm358 = vcmp.eq.f32.partialorder %v357, 8.507059e+37
      %v359 = vand.u32 %v233, 2147483648
      %v360 = vor.u32 1.1754944e-38, %v359
      %v361 = vsel %vm358, %v360, %v356
      %v362 = vmul.f32 1.0, %v361
      %v363 = vrcp.pop %v234
      %v364 = vmul.f32 %v234, %v363
      %v365 = vsub.f32 1.0, %v364
      %v366 = vmul.f32 %v363, %v365
      %v367 = vadd.f32 %v363, %v366
      %vm368 = vweird.f32 %v234
      %vm369 = vweird.f32 %v363
      %vm370 = vmor %vm368, %vm369
      %v371 = vsel %vm370, %v363, %v367
      %v372 = vand.u32 2147483647, %v234
      %vm373 = vcmp.eq.f32.partialorder %v372, 8.507059e+37
      %v374 = vand.u32 %v234, 2147483648
      %v375 = vor.u32 1.1754944e-38, %v374
      %v376 = vsel %vm373, %v375, %v371
      %v377 = vmul.f32 1.0, %v376
      %v378 = vrcp.pop %v235
      %v379 = vmul.f32 %v235, %v378
      %v380 = vsub.f32 1.0, %v379
      %v381 = vmul.f32 %v378, %v380
      %v382 = vadd.f32 %v378, %v381
      %vm383 = vweird.f32 %v235
      %vm384 = vweird.f32 %v378
      %vm385 = vmor %vm383, %vm384
      %v386 = vsel %vm385, %v378, %v382
      %v387 = vand.u32 2147483647, %v235
      %vm388 = vcmp.eq.f32.partialorder %v387, 8.507059e+37
      %v389 = vand.u32 %v235, 2147483648
      %v390 = vor.u32 1.1754944e-38, %v389
      %v391 = vsel %vm388, %v390, %v386
      %v392 = vmul.f32 1.0, %v391
      %v393 = vrcp.pop %v236
      %v394 = vmul.f32 %v236, %v393
      %v395 = vsub.f32 1.0, %v394
      %v396 = vmul.f32 %v393, %v395
      %v397 = vadd.f32 %v393, %v396
      %vm398 = vweird.f32 %v236
      %vm399 = vweird.f32 %v393
      %vm400 = vmor %vm398, %vm399
      %v401 = vsel %vm400, %v393, %v397
      %v402 = vand.u32 2147483647, %v236
      %vm403 = vcmp.eq.f32.partialorder %v402, 8.507059e+37
      %v404 = vand.u32 %v236, 2147483648
      %v405 = vor.u32 1.1754944e-38, %v404
      %v406 = vsel %vm403, %v405, %v401
      %v407 = vmul.f32 1.0, %v406
      %v408 = vrcp.pop %v237
      %v409 = vmul.f32 %v237, %v408
      %v410 = vsub.f32 1.0, %v409
      %v411 = vmul.f32 %v408, %v410
      %v412 = vadd.f32 %v408, %v411
      %vm413 = vweird.f32 %v237
      %vm414 = vweird.f32 %v408
      %vm415 = vmor %vm413, %vm414
      %v416 = vsel %vm415, %v408, %v412
      %v417 = vand.u32 2147483647, %v237
      %vm418 = vcmp.eq.f32.partialorder %v417, 8.507059e+37
      %v419 = vand.u32 %v237, 2147483648
      %v420 = vor.u32 1.1754944e-38, %v419
      %v421 = vsel %vm418, %v420, %v416
      %v422 = vmul.f32 1.0, %v421
      %v423 = vrcp.pop %v238
      %v424 = vmul.f32 %v238, %v423
      %v425 = vsub.f32 1.0, %v424
      %v426 = vmul.f32 %v423, %v425
      %v427 = vadd.f32 %v423, %v426
      %vm428 = vweird.f32 %v238
      %vm429 = vweird.f32 %v423
      %vm430 = vmor %vm428, %vm429
      %v431 = vsel %vm430, %v423, %v427
      %v432 = vand.u32 2147483647, %v238
      %vm433 = vcmp.eq.f32.partialorder %v432, 8.507059e+37
      %v434 = vand.u32 %v238, 2147483648
      %v435 = vor.u32 1.1754944e-38, %v434
      %v436 = vsel %vm433, %v435, %v431
      %v437 = vmul.f32 1.0, %v436
      %v438 = vrcp.pop %v239
      %v439 = vmul.f32 %v239, %v438
      %v440 = vsub.f32 1.0, %v439
      %v441 = vmul.f32 %v438, %v440
      %v442 = vadd.f32 %v438, %v441
      %vm443 = vweird.f32 %v239
      %vm444 = vweird.f32 %v438
      %vm445 = vmor %vm443, %vm444
      %v446 = vsel %vm445, %v438, %v442
      %v447 = vand.u32 2147483647, %v239
      %vm448 = vcmp.eq.f32.partialorder %v447, 8.507059e+37
      %v449 = vand.u32 %v239, 2147483648
      %v450 = vor.u32 1.1754944e-38, %v449
      %v451 = vsel %vm448, %v450, %v446
      %v452 = vmul.f32 1.0, %v451
      %v453 = vrcp.pop %v240
      %v454 = vmul.f32 %v240, %v453
      %v455 = vsub.f32 1.0, %v454
      %v456 = vmul.f32 %v453, %v455
      %v457 = vadd.f32 %v453, %v456
      %vm458 = vweird.f32 %v240
      %vm459 = vweird.f32 %v453
      %vm460 = vmor %vm458, %vm459
      %v461 = vsel %vm460, %v453, %v457
      %v462 = vand.u32 2147483647, %v240
      %vm463 = vcmp.eq.f32.partialorder %v462, 8.507059e+37
      %v464 = vand.u32 %v240, 2147483648
      %v465 = vor.u32 1.1754944e-38, %v464
      %v466 = vsel %vm463, %v465, %v461
      %v467 = vmul.f32 1.0, %v466
      %v468 = vrcp.pop %v241
      %v469 = vmul.f32 %v241, %v468
      %v470 = vsub.f32 1.0, %v469
      %v471 = vmul.f32 %v468, %v470
      %v472 = vadd.f32 %v468, %v471
      %vm473 = vweird.f32 %v241
      %vm474 = vweird.f32 %v468
      %vm475 = vmor %vm473, %vm474
      %v476 = vsel %vm475, %v468, %v472
      %v477 = vand.u32 2147483647, %v241
      %vm478 = vcmp.eq.f32.partialorder %v477, 8.507059e+37
      %v479 = vand.u32 %v241, 2147483648
      %v480 = vor.u32 1.1754944e-38, %v479
      %v481 = vsel %vm478, %v480, %v476
      %v482 = vmul.f32 1.0, %v481
      %v483 = vrcp.pop %v242
      %v484 = vmul.f32 %v242, %v483
      %v485 = vsub.f32 1.0, %v484
      %v486 = vmul.f32 %v483, %v485
      %v487 = vadd.f32 %v483, %v486
      %vm488 = vweird.f32 %v242
      %vm489 = vweird.f32 %v483
      %vm490 = vmor %vm488, %vm489
      %v491 = vsel %vm490, %v483, %v487
      %v492 = vand.u32 2147483647, %v242
      %vm493 = vcmp.eq.f32.partialorder %v492, 8.507059e+37
      %v494 = vand.u32 %v242, 2147483648
      %v495 = vor.u32 1.1754944e-38, %v494
      %v496 = vsel %vm493, %v495, %v491
      %v497 = vmul.f32 1.0, %v496
      %vm498 = vcmp.eq.f32.partialorder %v158, 1.0
      %vm499 = vcmp.eq.f32.partialorder %v159, 1.0
      %vm500 = vcmp.eq.f32.partialorder %v160, 1.0
      %vm501 = vcmp.eq.f32.partialorder %v161, 1.0
      %vm502 = vcmp.eq.f32.partialorder %v162, 1.0
      %vm503 = vcmp.eq.f32.partialorder %v163, 1.0
      %vm504 = vcmp.eq.f32.partialorder %v164, 1.0
      %vm505 = vcmp.eq.f32.partialorder %v165, 1.0
      %vm506 = vcmp.eq.f32.partialorder %v166, 1.0
      %vm507 = vcmp.eq.f32.partialorder %v167, 1.0
      %vm508 = vcmp.eq.f32.partialorder %v168, 1.0
      %vm509 = vcmp.eq.f32.partialorder %v169, 1.0
      %vm510 = vcmp.eq.f32.partialorder %v170, 1.0
      %vm511 = vcmp.eq.f32.partialorder %v171, 1.0
      %vm512 = vcmp.eq.f32.partialorder %v172, 1.0
      %vm513 = vcmp.eq.f32.partialorder %v173, 1.0
      %vm514 = vcmp.eq.f32.partialorder %v174, 1.0
      %v515 = vsub.f32 1.0, %v257
      %v516 = vsub.f32 1.0, %v272
      %v517 = vsub.f32 1.0, %v287
      %v518 = vsub.f32 1.0, %v302
      %v519 = vsub.f32 1.0, %v317
      %v520 = vsub.f32 1.0, %v332
      %v521 = vsub.f32 1.0, %v347
      %v522 = vsub.f32 1.0, %v362
      %v523 = vsub.f32 1.0, %v377
      %v524 = vsub.f32 1.0, %v392
      %v525 = vsub.f32 1.0, %v407
      %v526 = vsub.f32 1.0, %v422
      %v527 = vsub.f32 1.0, %v437
      %v528 = vsub.f32 1.0, %v452
      %v529 = vsub.f32 1.0, %v467
      %v530 = vsub.f32 1.0, %v482
      %v531 = vsub.f32 1.0, %v497
      %v532 = vsel %vm498, %v257, %v515
      %v533 = vsel %vm499, %v272, %v516
      %v534 = vsel %vm500, %v287, %v517
      %v535 = vsel %vm501, %v302, %v518
      %v536 = vsel %vm502, %v317, %v519
      %v537 = vsel %vm503, %v332, %v520
      %v538 = vsel %vm504, %v347, %v521
      %v539 = vsel %vm505, %v362, %v522
      %v540 = vsel %vm506, %v377, %v523
      %v541 = vsel %vm507, %v392, %v524
      %v542 = vsel %vm508, %v407, %v525
      %v543 = vsel %vm509, %v422, %v526
      %v544 = vsel %vm510, %v437, %v527
      %v545 = vsel %vm511, %v452, %v528
      %v546 = vsel %vm512, %v467, %v529
      %v547 = vsel %vm513, %v482, %v530
      %v548 = vsel %vm514, %v497, %v531
      %v549 = vsub.f32 1.0, %v532
      %v550 = vsub.f32 1.0, %v533
      %v551 = vsub.f32 1.0, %v534
      %v552 = vsub.f32 1.0, %v535
      %v553 = vsub.f32 1.0, %v536
      %v554 = vsub.f32 1.0, %v537
      %v555 = vsub.f32 1.0, %v538
      %v556 = vsub.f32 1.0, %v539
      %v557 = vsub.f32 1.0, %v540
      %v558 = vsub.f32 1.0, %v541
      %v559 = vsub.f32 1.0, %v542
      %v560 = vsub.f32 1.0, %v543
      %v561 = vsub.f32 1.0, %v544
      %v562 = vsub.f32 1.0, %v545
      %v563 = vsub.f32 1.0, %v546
      %v564 = vsub.f32 1.0, %v547
      %v565 = vsub.f32 1.0, %v548
      %v566 = vadd.f32 %v532, 1e-16
      %v567 = vadd.f32 %v533, 1e-16
      %v568 = vadd.f32 %v534, 1e-16
      %v569 = vadd.f32 %v535, 1e-16
      %v570 = vadd.f32 %v536, 1e-16
      %v571 = vadd.f32 %v537, 1e-16
      %v572 = vadd.f32 %v538, 1e-16
      %v573 = vadd.f32 %v539, 1e-16
      %v574 = vadd.f32 %v540, 1e-16
      %v575 = vadd.f32 %v541, 1e-16
      %v576 = vadd.f32 %v542, 1e-16
      %v577 = vadd.f32 %v543, 1e-16
      %v578 = vadd.f32 %v544, 1e-16
      %v579 = vadd.f32 %v545, 1e-16
      %v580 = vadd.f32 %v546, 1e-16
      %v581 = vadd.f32 %v547, 1e-16
      %v582 = vadd.f32 %v548, 1e-16
      %v583 = vlog2.pop %v566
      %v584 = vmul.f32 %v583, 0.6931472
      %v585 = vlog2.pop %v567
      %v586 = vmul.f32 %v585, 0.6931472
      %v587 = vlog2.pop %v568
      %v588 = vmul.f32 %v587, 0.6931472
      %v589 = vlog2.pop %v569
      %v590 = vmul.f32 %v589, 0.6931472
      %v591 = vlog2.pop %v570
      %v592 = vmul.f32 %v591, 0.6931472
      %v593 = vlog2.pop %v571
      %v594 = vmul.f32 %v593, 0.6931472
      %v595 = vlog2.pop %v572
      %v596 = vmul.f32 %v595, 0.6931472
      %v597 = vlog2.pop %v573
      %v598 = vmul.f32 %v597, 0.6931472
      %v599 = vlog2.pop %v574
      %v600 = vmul.f32 %v599, 0.6931472
      %v601 = vlog2.pop %v575
      %v602 = vmul.f32 %v601, 0.6931472
      %v603 = vlog2.pop %v576
      %v604 = vmul.f32 %v603, 0.6931472
      %v605 = vlog2.pop %v577
      %v606 = vmul.f32 %v605, 0.6931472
      %v607 = vlog2.pop %v578
      %v608 = vmul.f32 %v607, 0.6931472
      %v609 = vlog2.pop %v579
      %v610 = vmul.f32 %v609, 0.6931472
      %v611 = vlog2.pop %v580
      %v612 = vmul.f32 %v611, 0.6931472
      %v613 = vlog2.pop %v581
      %v614 = vmul.f32 %v613, 0.6931472
      %v615 = vlog2.pop %v582
      %v616 = vmul.f32 %v615, 0.6931472
      %v617 = vmul.f32 %v549, %v584
      %v618 = vmul.f32 %v550, %v586
      %v619 = vmul.f32 %v551, %v588
      %v620 = vmul.f32 %v552, %v590
      %v621 = vmul.f32 %v553, %v592
      %v622 = vmul.f32 %v554, %v594
      %v623 = vmul.f32 %v555, %v596
      %v624 = vmul.f32 %v556, %v598
      %v625 = vmul.f32 %v557, %v600
      %v626 = vmul.f32 %v558, %v602
      %v627 = vmul.f32 %v559, %v604
      %v628 = vmul.f32 %v560, %v606
      %v629 = vmul.f32 %v561, %v608
      %v630 = vmul.f32 %v562, %v610
      %v631 = vmul.f32 %v563, %v612
      %v632 = vmul.f32 %v564, %v614
      %v633 = vmul.f32 %v565, %v616
      %v634 = vsub.f32 0.0, %v617
      %v635 = vsub.f32 0.0, %v618
      %v636 = vsub.f32 0.0, %v619
      %v637 = vsub.f32 0.0, %v620
      %v638 = vsub.f32 0.0, %v621
      %v639 = vsub.f32 0.0, %v622
      %v640 = vsub.f32 0.0, %v623
      %v641 = vsub.f32 0.0, %v624
      %v642 = vsub.f32 0.0, %v625
      %v643 = vsub.f32 0.0, %v626
      %v644 = vsub.f32 0.0, %v627
      %v645 = vsub.f32 0.0, %v628
      %v646 = vsub.f32 0.0, %v629
      %v647 = vsub.f32 0.0, %v630
      %v648 = vsub.f32 0.0, %v631
      %v649 = vsub.f32 0.0, %v632
      %v650 = vsub.f32 0.0, %v633
      %v651 = vadd.f32 %v124, %v634
      %v652 = vadd.f32 %v125, %v635
      %v653 = vadd.f32 %v126, %v636
      %v654 = vadd.f32 %v127, %v637
      %v655 = vadd.f32 %v128, %v638
      %v656 = vadd.f32 %v129, %v639
      %v657 = vadd.f32 %v130, %v640
      %v658 = vadd.f32 %v131, %v641
      %v659 = vadd.f32 %v132, %v642
      %v660 = vadd.f32 %v133, %v643
      %v661 = vadd.f32 %v134, %v644
      %v662 = vadd.f32 %v135, %v645
      %v663 = vadd.f32 %v136, %v646
      %v664 = vadd.f32 %v137, %v647
      %v665 = vadd.f32 %v138, %v648
      %v666 = vadd.f32 %v139, %v649
      %v667 = vadd.f32 %v140, %v650
      %668 = vst [vmem:[#allocation2] sm:$0xff] %v651
      %669 = vst [vmem:[#allocation2 + $0x8] sm:$0xff] %v652
      %670 = vst [vmem:[#allocation2 + $0x10] sm:$0xff] %v653
      %671 = vst [vmem:[#allocation2 + $0x18] sm:$0xff] %v654
      %672 = vst [vmem:[#allocation2 + $0x20] sm:$0xff] %v655
      %673 = vst [vmem:[#allocation2 + $0x28] sm:$0xff] %v656
      %674 = vst [vmem:[#allocation2 + $0x30] sm:$0xff] %v657
      %675 = vst [vmem:[#allocation2 + $0x38] sm:$0xff] %v658
      %676 = vst [vmem:[#allocation2 + $0x40] sm:$0xff] %v659
      %677 = vst [vmem:[#allocation2 + $0x48] sm:$0xff] %v660
      %678 = vst [vmem:[#allocation2 + $0x50] sm:$0xff] %v661
      %679 = vst [vmem:[#allocation2 + $0x58] sm:$0xff] %v662
      %680 = vst [vmem:[#allocation2 + $0x60] sm:$0xff] %v663
      %681 = vst [vmem:[#allocation2 + $0x68] sm:$0xff] %v664
      %682 = vst [vmem:[#allocation2 + $0x70] sm:$0xff] %v665
      %683 = vst [vmem:[#allocation2 + $0x78] sm:$0xff] %v666
      %684 = vst [vmem:[#allocation2 + $0x80] sm:$0xff] %v667
    $region33: #{tpu_custom_call.1} parent=1 // pred_fallthru
      _
    %p685 = scmp.gt.s32.totalorder %s119, 4352
    // Predicated region
    $region34: #{tpu_custom_call.1} parent=1 // pred_check
      %p686 = pneg %p685
    $region35: #{tpu_custom_call.1} parent=1 // pred_check_branch
      %688 = sbr.rel (%p686) target = $region37
    $region36: #{tpu_custom_call.1} parent=1 // pred_region
      %v689 = vlaneseq
      %v690 = vshrl.u32 %v689, 7
      %v691 = vadd.s32 %v690, 8
      %v692 = vadd.s32 %v690, 16
      %v693 = vadd.s32 %v690, 24
      %v694 = vadd.s32 %v690, 32
      %v695 = vadd.s32 %v690, 40
      %v696 = vadd.s32 %v690, 48
      %v697 = vadd.s32 %v690, 56
      %v698 = vadd.s32 %v690, 64
      %v699 = vadd.s32 %v690, 72
      %v700 = vadd.s32 %v690, 80
      %v701 = vadd.s32 %v690, 88
      %v702 = vadd.s32 %v690, 96
      %v703 = vadd.s32 %v690, 104
      %v704 = vadd.s32 %v690, 112
      %v705 = vadd.s32 %v690, 120
      %v706 = vadd.s32 %v690, 128
      %v707 = vlaneseq
      %v708 = vand.u32 %v707, 127
      %v709 = vmul.u32 %v690, 128
      %v710 = vmul.u32 %v691, 128
      %v711 = vmul.u32 %v692, 128
      %v712 = vmul.u32 %v693, 128
      %v713 = vmul.u32 %v694, 128
      %v714 = vmul.u32 %v695, 128
      %v715 = vmul.u32 %v696, 128
      %v716 = vmul.u32 %v697, 128
      %v717 = vmul.u32 %v698, 128
      %v718 = vmul.u32 %v699, 128
      %v719 = vmul.u32 %v700, 128
      %v720 = vmul.u32 %v701, 128
      %v721 = vmul.u32 %v702, 128
      %v722 = vmul.u32 %v703, 128
      %v723 = vmul.u32 %v704, 128
      %v724 = vmul.u32 %v705, 128
      %v725 = vmul.u32 %v706, 128
      %v726 = vadd.s32 %v709, %v708
      %v727 = vadd.s32 %v710, %v708
      %v728 = vadd.s32 %v711, %v708
      %v729 = vadd.s32 %v712, %v708
      %v730 = vadd.s32 %v713, %v708
      %v731 = vadd.s32 %v714, %v708
      %v732 = vadd.s32 %v715, %v708
      %v733 = vadd.s32 %v716, %v708
      %v734 = vadd.s32 %v717, %v708
      %v735 = vadd.s32 %v718, %v708
      %v736 = vadd.s32 %v719, %v708
      %v737 = vadd.s32 %v720, %v708
      %v738 = vadd.s32 %v721, %v708
      %v739 = vadd.s32 %v722, %v708
      %v740 = vadd.s32 %v723, %v708
      %v741 = vadd.s32 %v724, %v708
      %v742 = vadd.s32 %v725, %v708
      %v743 = vstv %s118
      %v744 = vadd.s32 %v743, %v726
      %v745 = vadd.s32 %v743, %v727
      %v746 = vadd.s32 %v743, %v728
      %v747 = vadd.s32 %v743, %v729
      %v748 = vadd.s32 %v743, %v730
      %v749 = vadd.s32 %v743, %v731
      %v750 = vadd.s32 %v743, %v732
      %v751 = vadd.s32 %v743, %v733
      %v752 = vadd.s32 %v743, %v734
      %v753 = vadd.s32 %v743, %v735
      %v754 = vadd.s32 %v743, %v736
      %v755 = vadd.s32 %v743, %v737
      %v756 = vadd.s32 %v743, %v738
      %v757 = vadd.s32 %v743, %v739
      %v758 = vadd.s32 %v743, %v740
      %v759 = vadd.s32 %v743, %v741
      %v760 = vadd.s32 %v743, %v742
      %v761 = vld [vmem:[#allocation2] sm:$0xff]
      %v762 = vld [vmem:[#allocation2 + $0x8] sm:$0xff]
      %v763 = vld [vmem:[#allocation2 + $0x10] sm:$0xff]
      %v764 = vld [vmem:[#allocation2 + $0x18] sm:$0xff]
      %v765 = vld [vmem:[#allocation2 + $0x20] sm:$0xff]
      %v766 = vld [vmem:[#allocation2 + $0x28] sm:$0xff]
      %v767 = vld [vmem:[#allocation2 + $0x30] sm:$0xff]
      %v768 = vld [vmem:[#allocation2 + $0x38] sm:$0xff]
      %v769 = vld [vmem:[#allocation2 + $0x40] sm:$0xff]
      %v770 = vld [vmem:[#allocation2 + $0x48] sm:$0xff]
      %v771 = vld [vmem:[#allocation2 + $0x50] sm:$0xff]
      %v772 = vld [vmem:[#allocation2 + $0x58] sm:$0xff]
      %v773 = vld [vmem:[#allocation2 + $0x60] sm:$0xff]
      %v774 = vld [vmem:[#allocation2 + $0x68] sm:$0xff]
      %v775 = vld [vmem:[#allocation2 + $0x70] sm:$0xff]
      %v776 = vld [vmem:[#allocation2 + $0x78] sm:$0xff]
      %v777 = vld [vmem:[#allocation2 + $0x80] sm:$0xff]
      %vm778 = vcmp.lt.s32.totalorder %v744, 4352
      %vm779 = vcmp.lt.s32.totalorder %v745, 4352
      %vm780 = vcmp.lt.s32.totalorder %v746, 4352
      %vm781 = vcmp.lt.s32.totalorder %v747, 4352
      %vm782 = vcmp.lt.s32.totalorder %v748, 4352
      %vm783 = vcmp.lt.s32.totalorder %v749, 4352
      %vm784 = vcmp.lt.s32.totalorder %v750, 4352
      %vm785 = vcmp.lt.s32.totalorder %v751, 4352
      %vm786 = vcmp.lt.s32.totalorder %v752, 4352
      %vm787 = vcmp.lt.s32.totalorder %v753, 4352
      %vm788 = vcmp.lt.s32.totalorder %v754, 4352
      %vm789 = vcmp.lt.s32.totalorder %v755, 4352
      %vm790 = vcmp.lt.s32.totalorder %v756, 4352
      %vm791 = vcmp.lt.s32.totalorder %v757, 4352
      %vm792 = vcmp.lt.s32.totalorder %v758, 4352
      %vm793 = vcmp.lt.s32.totalorder %v759, 4352
      %vm794 = vcmp.lt.s32.totalorder %v760, 4352
      %v795 = vld [vmem:[#allocation3] sm:$0xff]
      %v796 = vld [vmem:[#allocation3 + $0x8] sm:$0xff]
      %v797 = vld [vmem:[#allocation3 + $0x10] sm:$0xff]
      %v798 = vld [vmem:[#allocation3 + $0x18] sm:$0xff]
      %v799 = vld [vmem:[#allocation3 + $0x20] sm:$0xff]
      %v800 = vld [vmem:[#allocation3 + $0x28] sm:$0xff]
      %v801 = vld [vmem:[#allocation3 + $0x30] sm:$0xff]
      %v802 = vld [vmem:[#allocation3 + $0x38] sm:$0xff]
      %v803 = vld [vmem:[#allocation3 + $0x40] sm:$0xff]
      %v804 = vld [vmem:[#allocation3 + $0x48] sm:$0xff]
      %v805 = vld [vmem:[#allocation3 + $0x50] sm:$0xff]
      %v806 = vld [vmem:[#allocation3 + $0x58] sm:$0xff]
      %v807 = vld [vmem:[#allocation3 + $0x60] sm:$0xff]
      %v808 = vld [vmem:[#allocation3 + $0x68] sm:$0xff]
      %v809 = vld [vmem:[#allocation3 + $0x70] sm:$0xff]
      %v810 = vld [vmem:[#allocation3 + $0x78] sm:$0xff]
      %v811 = vld [vmem:[#allocation3 + $0x80] sm:$0xff]
      %v812 = vld [vmem:[#allocation6] sm:$0xff]
      %v813 = vld [vmem:[#allocation6 + $0x8] sm:$0xff]
      %v814 = vld [vmem:[#allocation6 + $0x10] sm:$0xff]
      %v815 = vld [vmem:[#allocation6 + $0x18] sm:$0xff]
      %v816 = vld [vmem:[#allocation6 + $0x20] sm:$0xff]
      %v817 = vld [vmem:[#allocation6 + $0x28] sm:$0xff]
      %v818 = vld [vmem:[#allocation6 + $0x30] sm:$0xff]
      %v819 = vld [vmem:[#allocation6 + $0x38] sm:$0xff]
      %v820 = vld [vmem:[#allocation6 + $0x40] sm:$0xff]
      %v821 = vld [vmem:[#allocation6 + $0x48] sm:$0xff]
      %v822 = vld [vmem:[#allocation6 + $0x50] sm:$0xff]
      %v823 = vld [vmem:[#allocation6 + $0x58] sm:$0xff]
      %v824 = vld [vmem:[#allocation6 + $0x60] sm:$0xff]
      %v825 = vld [vmem:[#allocation6 + $0x68] sm:$0xff]
      %v826 = vld [vmem:[#allocation6 + $0x70] sm:$0xff]
      %v827 = vld [vmem:[#allocation6 + $0x78] sm:$0xff]
      %v828 = vld [vmem:[#allocation6 + $0x80] sm:$0xff]
      %v829 = vxor.u32 %v795, 2147483648
      %v830 = vxor.u32 %v796, 2147483648
      %v831 = vxor.u32 %v797, 2147483648
      %v832 = vxor.u32 %v798, 2147483648
      %v833 = vxor.u32 %v799, 2147483648
      %v834 = vxor.u32 %v800, 2147483648
      %v835 = vxor.u32 %v801, 2147483648
      %v836 = vxor.u32 %v802, 2147483648
      %v837 = vxor.u32 %v803, 2147483648
      %v838 = vxor.u32 %v804, 2147483648
      %v839 = vxor.u32 %v805, 2147483648
      %v840 = vxor.u32 %v806, 2147483648
      %v841 = vxor.u32 %v807, 2147483648
      %v842 = vxor.u32 %v808, 2147483648
      %v843 = vxor.u32 %v809, 2147483648
      %v844 = vxor.u32 %v810, 2147483648
      %v845 = vxor.u32 %v811, 2147483648
      %v846 = vmul.f32 %v829, 1.442695
      %v847 = vpow.pop %v846
      %v848 = vmul.f32 %v830, 1.442695
      %v849 = vpow.pop %v848
      %v850 = vmul.f32 %v831, 1.442695
      %v851 = vpow.pop %v850
      %v852 = vmul.f32 %v832, 1.442695
      %v853 = vpow.pop %v852
      %v854 = vmul.f32 %v833, 1.442695
      %v855 = vpow.pop %v854
      %v856 = vmul.f32 %v834, 1.442695
      %v857 = vpow.pop %v856
      %v858 = vmul.f32 %v835, 1.442695
      %v859 = vpow.pop %v858
      %v860 = vmul.f32 %v836, 1.442695
      %v861 = vpow.pop %v860
      %v862 = vmul.f32 %v837, 1.442695
      %v863 = vpow.pop %v862
      %v864 = vmul.f32 %v838, 1.442695
      %v865 = vpow.pop %v864
      %v866 = vmul.f32 %v839, 1.442695
      %v867 = vpow.pop %v866
      %v868 = vmul.f32 %v840, 1.442695
      %v869 = vpow.pop %v868
      %v870 = vmul.f32 %v841, 1.442695
      %v871 = vpow.pop %v870
      %v872 = vmul.f32 %v842, 1.442695
      %v873 = vpow.pop %v872
      %v874 = vmul.f32 %v843, 1.442695
      %v875 = vpow.pop %v874
      %v876 = vmul.f32 %v844, 1.442695
      %v877 = vpow.pop %v876
      %v878 = vmul.f32 %v845, 1.442695
      %v879 = vpow.pop %v878
      %v880 = vadd.f32 %v847, 1.0
      %v881 = vadd.f32 %v849, 1.0
      %v882 = vadd.f32 %v851, 1.0
      %v883 = vadd.f32 %v853, 1.0
      %v884 = vadd.f32 %v855, 1.0
      %v885 = vadd.f32 %v857, 1.0
      %v886 = vadd.f32 %v859, 1.0
      %v887 = vadd.f32 %v861, 1.0
      %v888 = vadd.f32 %v863, 1.0
      %v889 = vadd.f32 %v865, 1.0
      %v890 = vadd.f32 %v867, 1.0
      %v891 = vadd.f32 %v869, 1.0
      %v892 = vadd.f32 %v871, 1.0
      %v893 = vadd.f32 %v873, 1.0
      %v894 = vadd.f32 %v875, 1.0
      %v895 = vadd.f32 %v877, 1.0
      %v896 = vadd.f32 %v879, 1.0
      %v897 = vrcp.pop %v880
      %v898 = vmul.f32 %v880, %v897
      %v899 = vsub.f32 1.0, %v898
      %v900 = vmul.f32 %v897, %v899
      %v901 = vadd.f32 %v897, %v900
      %vm902 = vweird.f32 %v880
      %vm903 = vweird.f32 %v897
      %vm904 = vmor %vm902, %vm903
      %v905 = vsel %vm904, %v897, %v901
      %v906 = vand.u32 2147483647, %v880
      %vm907 = vcmp.eq.f32.partialorder %v906, 8.507059e+37
      %v908 = vand.u32 %v880, 2147483648
      %v909 = vor.u32 1.1754944e-38, %v908
      %v910 = vsel %vm907, %v909, %v905
      %v911 = vmul.f32 1.0, %v910
      %v912 = vrcp.pop %v881
      %v913 = vmul.f32 %v881, %v912
      %v914 = vsub.f32 1.0, %v913
      %v915 = vmul.f32 %v912, %v914
      %v916 = vadd.f32 %v912, %v915
      %vm917 = vweird.f32 %v881
      %vm918 = vweird.f32 %v912
      %vm919 = vmor %vm917, %vm918
      %v920 = vsel %vm919, %v912, %v916
      %v921 = vand.u32 2147483647, %v881
      %vm922 = vcmp.eq.f32.partialorder %v921, 8.507059e+37
      %v923 = vand.u32 %v881, 2147483648
      %v924 = vor.u32 1.1754944e-38, %v923
      %v925 = vsel %vm922, %v924, %v920
      %v926 = vmul.f32 1.0, %v925
      %v927 = vrcp.pop %v882
      %v928 = vmul.f32 %v882, %v927
      %v929 = vsub.f32 1.0, %v928
      %v930 = vmul.f32 %v927, %v929
      %v931 = vadd.f32 %v927, %v930
      %vm932 = vweird.f32 %v882
      %vm933 = vweird.f32 %v927
      %vm934 = vmor %vm932, %vm933
      %v935 = vsel %vm934, %v927, %v931
      %v936 = vand.u32 2147483647, %v882
      %vm937 = vcmp.eq.f32.partialorder %v936, 8.507059e+37
      %v938 = vand.u32 %v882, 2147483648
      %v939 = vor.u32 1.1754944e-38, %v938
      %v940 = vsel %vm937, %v939, %v935
      %v941 = vmul.f32 1.0, %v940
      %v942 = vrcp.pop %v883
      %v943 = vmul.f32 %v883, %v942
      %v944 = vsub.f32 1.0, %v943
      %v945 = vmul.f32 %v942, %v944
      %v946 = vadd.f32 %v942, %v945
      %vm947 = vweird.f32 %v883
      %vm948 = vweird.f32 %v942
      %vm949 = vmor %vm947, %vm948
      %v950 = vsel %vm949, %v942, %v946
      %v951 = vand.u32 2147483647, %v883
      %vm952 = vcmp.eq.f32.partialorder %v951, 8.507059e+37
      %v953 = vand.u32 %v883, 2147483648
      %v954 = vor.u32 1.1754944e-38, %v953
      %v955 = vsel %vm952, %v954, %v950
      %v956 = vmul.f32 1.0, %v955
      %v957 = vrcp.pop %v884
      %v958 = vmul.f32 %v884, %v957
      %v959 = vsub.f32 1.0, %v958
      %v960 = vmul.f32 %v957, %v959
      %v961 = vadd.f32 %v957, %v960
      %vm962 = vweird.f32 %v884
      %vm963 = vweird.f32 %v957
      %vm964 = vmor %vm962, %vm963
      %v965 = vsel %vm964, %v957, %v961
      %v966 = vand.u32 2147483647, %v884
      %vm967 = vcmp.eq.f32.partialorder %v966, 8.507059e+37
      %v968 = vand.u32 %v884, 2147483648
      %v969 = vor.u32 1.1754944e-38, %v968
      %v970 = vsel %vm967, %v969, %v965
      %v971 = vmul.f32 1.0, %v970
      %v972 = vrcp.pop %v885
      %v973 = vmul.f32 %v885, %v972
      %v974 = vsub.f32 1.0, %v973
      %v975 = vmul.f32 %v972, %v974
      %v976 = vadd.f32 %v972, %v975
      %vm977 = vweird.f32 %v885
      %vm978 = vweird.f32 %v972
      %vm979 = vmor %vm977, %vm978
      %v980 = vsel %vm979, %v972, %v976
      %v981 = vand.u32 2147483647, %v885
      %vm982 = vcmp.eq.f32.partialorder %v981, 8.507059e+37
      %v983 = vand.u32 %v885, 2147483648
      %v984 = vor.u32 1.1754944e-38, %v983
      %v985 = vsel %vm982, %v984, %v980
      %v986 = vmul.f32 1.0, %v985
      %v987 = vrcp.pop %v886
      %v988 = vmul.f32 %v886, %v987
      %v989 = vsub.f32 1.0, %v988
      %v990 = vmul.f32 %v987, %v989
      %v991 = vadd.f32 %v987, %v990
      %vm992 = vweird.f32 %v886
      %vm993 = vweird.f32 %v987
      %vm994 = vmor %vm992, %vm993
      %v995 = vsel %vm994, %v987, %v991
      %v996 = vand.u32 2147483647, %v886
      %vm997 = vcmp.eq.f32.partialorder %v996, 8.507059e+37
      %v998 = vand.u32 %v886, 2147483648
      %v999 = vor.u32 1.1754944e-38, %v998
      %v1000 = vsel %vm997, %v999, %v995
      %v1001 = vmul.f32 1.0, %v1000
      %v1002 = vrcp.pop %v887
      %v1003 = vmul.f32 %v887, %v1002
      %v1004 = vsub.f32 1.0, %v1003
      %v1005 = vmul.f32 %v1002, %v1004
      %v1006 = vadd.f32 %v1002, %v1005
      %vm1007 = vweird.f32 %v887
      %vm1008 = vweird.f32 %v1002
      %vm1009 = vmor %vm1007, %vm1008
      %v1010 = vsel %vm1009, %v1002, %v1006
      %v1011 = vand.u32 2147483647, %v887
      %vm1012 = vcmp.eq.f32.partialorder %v1011, 8.507059e+37
      %v1013 = vand.u32 %v887, 2147483648
      %v1014 = vor.u32 1.1754944e-38, %v1013
      %v1015 = vsel %vm1012, %v1014, %v1010
      %v1016 = vmul.f32 1.0, %v1015
      %v1017 = vrcp.pop %v888
      %v1018 = vmul.f32 %v888, %v1017
      %v1019 = vsub.f32 1.0, %v1018
      %v1020 = vmul.f32 %v1017, %v1019
      %v1021 = vadd.f32 %v1017, %v1020
      %vm1022 = vweird.f32 %v888
      %vm1023 = vweird.f32 %v1017
      %vm1024 = vmor %vm1022, %vm1023
      %v1025 = vsel %vm1024, %v1017, %v1021
      %v1026 = vand.u32 2147483647, %v888
      %vm1027 = vcmp.eq.f32.partialorder %v1026, 8.507059e+37
      %v1028 = vand.u32 %v888, 2147483648
      %v1029 = vor.u32 1.1754944e-38, %v1028
      %v1030 = vsel %vm1027, %v1029, %v1025
      %v1031 = vmul.f32 1.0, %v1030
      %v1032 = vrcp.pop %v889
      %v1033 = vmul.f32 %v889, %v1032
      %v1034 = vsub.f32 1.0, %v1033
      %v1035 = vmul.f32 %v1032, %v1034
      %v1036 = vadd.f32 %v1032, %v1035
      %vm1037 = vweird.f32 %v889
      %vm1038 = vweird.f32 %v1032
      %vm1039 = vmor %vm1037, %vm1038
      %v1040 = vsel %vm1039, %v1032, %v1036
      %v1041 = vand.u32 2147483647, %v889
      %vm1042 = vcmp.eq.f32.partialorder %v1041, 8.507059e+37
      %v1043 = vand.u32 %v889, 2147483648
      %v1044 = vor.u32 1.1754944e-38, %v1043
      %v1045 = vsel %vm1042, %v1044, %v1040
      %v1046 = vmul.f32 1.0, %v1045
      %v1047 = vrcp.pop %v890
      %v1048 = vmul.f32 %v890, %v1047
      %v1049 = vsub.f32 1.0, %v1048
      %v1050 = vmul.f32 %v1047, %v1049
      %v1051 = vadd.f32 %v1047, %v1050
      %vm1052 = vweird.f32 %v890
      %vm1053 = vweird.f32 %v1047
      %vm1054 = vmor %vm1052, %vm1053
      %v1055 = vsel %vm1054, %v1047, %v1051
      %v1056 = vand.u32 2147483647, %v890
      %vm1057 = vcmp.eq.f32.partialorder %v1056, 8.507059e+37
      %v1058 = vand.u32 %v890, 2147483648
      %v1059 = vor.u32 1.1754944e-38, %v1058
      %v1060 = vsel %vm1057, %v1059, %v1055
      %v1061 = vmul.f32 1.0, %v1060
      %v1062 = vrcp.pop %v891
      %v1063 = vmul.f32 %v891, %v1062
      %v1064 = vsub.f32 1.0, %v1063
      %v1065 = vmul.f32 %v1062, %v1064
      %v1066 = vadd.f32 %v1062, %v1065
      %vm1067 = vweird.f32 %v891
      %vm1068 = vweird.f32 %v1062
      %vm1069 = vmor %vm1067, %vm1068
      %v1070 = vsel %vm1069, %v1062, %v1066
      %v1071 = vand.u32 2147483647, %v891
      %vm1072 = vcmp.eq.f32.partialorder %v1071, 8.507059e+37
      %v1073 = vand.u32 %v891, 2147483648
      %v1074 = vor.u32 1.1754944e-38, %v1073
      %v1075 = vsel %vm1072, %v1074, %v1070
      %v1076 = vmul.f32 1.0, %v1075
      %v1077 = vrcp.pop %v892
      %v1078 = vmul.f32 %v892, %v1077
      %v1079 = vsub.f32 1.0, %v1078
      %v1080 = vmul.f32 %v1077, %v1079
      %v1081 = vadd.f32 %v1077, %v1080
      %vm1082 = vweird.f32 %v892
      %vm1083 = vweird.f32 %v1077
      %vm1084 = vmor %vm1082, %vm1083
      %v1085 = vsel %vm1084, %v1077, %v1081
      %v1086 = vand.u32 2147483647, %v892
      %vm1087 = vcmp.eq.f32.partialorder %v1086, 8.507059e+37
      %v1088 = vand.u32 %v892, 2147483648
      %v1089 = vor.u32 1.1754944e-38, %v1088
      %v1090 = vsel %vm1087, %v1089, %v1085
      %v1091 = vmul.f32 1.0, %v1090
      %v1092 = vrcp.pop %v893
      %v1093 = vmul.f32 %v893, %v1092
      %v1094 = vsub.f32 1.0, %v1093
      %v1095 = vmul.f32 %v1092, %v1094
      %v1096 = vadd.f32 %v1092, %v1095
      %vm1097 = vweird.f32 %v893
      %vm1098 = vweird.f32 %v1092
      %vm1099 = vmor %vm1097, %vm1098
      %v1100 = vsel %vm1099, %v1092, %v1096
      %v1101 = vand.u32 2147483647, %v893
      %vm1102 = vcmp.eq.f32.partialorder %v1101, 8.507059e+37
      %v1103 = vand.u32 %v893, 2147483648
      %v1104 = vor.u32 1.1754944e-38, %v1103
      %v1105 = vsel %vm1102, %v1104, %v1100
      %v1106 = vmul.f32 1.0, %v1105
      %v1107 = vrcp.pop %v894
      %v1108 = vmul.f32 %v894, %v1107
      %v1109 = vsub.f32 1.0, %v1108
      %v1110 = vmul.f32 %v1107, %v1109
      %v1111 = vadd.f32 %v1107, %v1110
      %vm1112 = vweird.f32 %v894
      %vm1113 = vweird.f32 %v1107
      %vm1114 = vmor %vm1112, %vm1113
      %v1115 = vsel %vm1114, %v1107, %v1111
      %v1116 = vand.u32 2147483647, %v894
      %vm1117 = vcmp.eq.f32.partialorder %v1116, 8.507059e+37
      %v1118 = vand.u32 %v894, 2147483648
      %v1119 = vor.u32 1.1754944e-38, %v1118
      %v1120 = vsel %vm1117, %v1119, %v1115
      %v1121 = vmul.f32 1.0, %v1120
      %v1122 = vrcp.pop %v895
      %v1123 = vmul.f32 %v895, %v1122
      %v1124 = vsub.f32 1.0, %v1123
      %v1125 = vmul.f32 %v1122, %v1124
      %v1126 = vadd.f32 %v1122, %v1125
      %vm1127 = vweird.f32 %v895
      %vm1128 = vweird.f32 %v1122
      %vm1129 = vmor %vm1127, %vm1128
      %v1130 = vsel %vm1129, %v1122, %v1126
      %v1131 = vand.u32 2147483647, %v895
      %vm1132 = vcmp.eq.f32.partialorder %v1131, 8.507059e+37
      %v1133 = vand.u32 %v895, 2147483648
      %v1134 = vor.u32 1.1754944e-38, %v1133
      %v1135 = vsel %vm1132, %v1134, %v1130
      %v1136 = vmul.f32 1.0, %v1135
      %v1137 = vrcp.pop %v896
      %v1138 = vmul.f32 %v896, %v1137
      %v1139 = vsub.f32 1.0, %v1138
      %v1140 = vmul.f32 %v1137, %v1139
      %v1141 = vadd.f32 %v1137, %v1140
      %vm1142 = vweird.f32 %v896
      %vm1143 = vweird.f32 %v1137
      %vm1144 = vmor %vm1142, %vm1143
      %v1145 = vsel %vm1144, %v1137, %v1141
      %v1146 = vand.u32 2147483647, %v896
      %vm1147 = vcmp.eq.f32.partialorder %v1146, 8.507059e+37
      %v1148 = vand.u32 %v896, 2147483648
      %v1149 = vor.u32 1.1754944e-38, %v1148
      %v1150 = vsel %vm1147, %v1149, %v1145
      %v1151 = vmul.f32 1.0, %v1150
      %vm1152 = vcmp.eq.f32.partialorder %v812, 1.0
      %vm1153 = vcmp.eq.f32.partialorder %v813, 1.0
      %vm1154 = vcmp.eq.f32.partialorder %v814, 1.0
      %vm1155 = vcmp.eq.f32.partialorder %v815, 1.0
      %vm1156 = vcmp.eq.f32.partialorder %v816, 1.0
      %vm1157 = vcmp.eq.f32.partialorder %v817, 1.0
      %vm1158 = vcmp.eq.f32.partialorder %v818, 1.0
      %vm1159 = vcmp.eq.f32.partialorder %v819, 1.0
      %vm1160 = vcmp.eq.f32.partialorder %v820, 1.0
      %vm1161 = vcmp.eq.f32.partialorder %v821, 1.0
      %vm1162 = vcmp.eq.f32.partialorder %v822, 1.0
      %vm1163 = vcmp.eq.f32.partialorder %v823, 1.0
      %vm1164 = vcmp.eq.f32.partialorder %v824, 1.0
      %vm1165 = vcmp.eq.f32.partialorder %v825, 1.0
      %vm1166 = vcmp.eq.f32.partialorder %v826, 1.0
      %vm1167 = vcmp.eq.f32.partialorder %v827, 1.0
      %vm1168 = vcmp.eq.f32.partialorder %v828, 1.0
      %v1169 = vsub.f32 1.0, %v911
      %v1170 = vsub.f32 1.0, %v926
      %v1171 = vsub.f32 1.0, %v941
      %v1172 = vsub.f32 1.0, %v956
      %v1173 = vsub.f32 1.0, %v971
      %v1174 = vsub.f32 1.0, %v986
      %v1175 = vsub.f32 1.0, %v1001
      %v1176 = vsub.f32 1.0, %v1016
      %v1177 = vsub.f32 1.0, %v1031
      %v1178 = vsub.f32 1.0, %v1046
      %v1179 = vsub.f32 1.0, %v1061
      %v1180 = vsub.f32 1.0, %v1076
      %v1181 = vsub.f32 1.0, %v1091
      %v1182 = vsub.f32 1.0, %v1106
      %v1183 = vsub.f32 1.0, %v1121
      %v1184 = vsub.f32 1.0, %v1136
      %v1185 = vsub.f32 1.0, %v1151
      %v1186 = vsel %vm1152, %v911, %v1169
      %v1187 = vsel %vm1153, %v926, %v1170
      %v1188 = vsel %vm1154, %v941, %v1171
      %v1189 = vsel %vm1155, %v956, %v1172
      %v1190 = vsel %vm1156, %v971, %v1173
      %v1191 = vsel %vm1157, %v986, %v1174
      %v1192 = vsel %vm1158, %v1001, %v1175
      %v1193 = vsel %vm1159, %v1016, %v1176
      %v1194 = vsel %vm1160, %v1031, %v1177
      %v1195 = vsel %vm1161, %v1046, %v1178
      %v1196 = vsel %vm1162, %v1061, %v1179
      %v1197 = vsel %vm1163, %v1076, %v1180
      %v1198 = vsel %vm1164, %v1091, %v1181
      %v1199 = vsel %vm1165, %v1106, %v1182
      %v1200 = vsel %vm1166, %v1121, %v1183
      %v1201 = vsel %vm1167, %v1136, %v1184
      %v1202 = vsel %vm1168, %v1151, %v1185
      %v1203 = vsub.f32 1.0, %v1186
      %v1204 = vsub.f32 1.0, %v1187
      %v1205 = vsub.f32 1.0, %v1188
      %v1206 = vsub.f32 1.0, %v1189
      %v1207 = vsub.f32 1.0, %v1190
      %v1208 = vsub.f32 1.0, %v1191
      %v1209 = vsub.f32 1.0, %v1192
      %v1210 = vsub.f32 1.0, %v1193
      %v1211 = vsub.f32 1.0, %v1194
      %v1212 = vsub.f32 1.0, %v1195
      %v1213 = vsub.f32 1.0, %v1196
      %v1214 = vsub.f32 1.0, %v1197
      %v1215 = vsub.f32 1.0, %v1198
      %v1216 = vsub.f32 1.0, %v1199
      %v1217 = vsub.f32 1.0, %v1200
      %v1218 = vsub.f32 1.0, %v1201
      %v1219 = vsub.f32 1.0, %v1202
      %v1220 = vadd.f32 %v1186, 1e-16
      %v1221 = vadd.f32 %v1187, 1e-16
      %v1222 = vadd.f32 %v1188, 1e-16
      %v1223 = vadd.f32 %v1189, 1e-16
      %v1224 = vadd.f32 %v1190, 1e-16
      %v1225 = vadd.f32 %v1191, 1e-16
      %v1226 = vadd.f32 %v1192, 1e-16
      %v1227 = vadd.f32 %v1193, 1e-16
      %v1228 = vadd.f32 %v1194, 1e-16
      %v1229 = vadd.f32 %v1195, 1e-16
      %v1230 = vadd.f32 %v1196, 1e-16
      %v1231 = vadd.f32 %v1197, 1e-16
      %v1232 = vadd.f32 %v1198, 1e-16
      %v1233 = vadd.f32 %v1199, 1e-16
      %v1234 = vadd.f32 %v1200, 1e-16
      %v1235 = vadd.f32 %v1201, 1e-16
      %v1236 = vadd.f32 %v1202, 1e-16
      %v1237 = vlog2.pop %v1220
      %v1238 = vmul.f32 %v1237, 0.6931472
      %v1239 = vlog2.pop %v1221
      %v1240 = vmul.f32 %v1239, 0.6931472
      %v1241 = vlog2.pop %v1222
      %v1242 = vmul.f32 %v1241, 0.6931472
      %v1243 = vlog2.pop %v1223
      %v1244 = vmul.f32 %v1243, 0.6931472
      %v1245 = vlog2.pop %v1224
      %v1246 = vmul.f32 %v1245, 0.6931472
      %v1247 = vlog2.pop %v1225
      %v1248 = vmul.f32 %v1247, 0.6931472
      %v1249 = vlog2.pop %v1226
      %v1250 = vmul.f32 %v1249, 0.6931472
      %v1251 = vlog2.pop %v1227
      %v1252 = vmul.f32 %v1251, 0.6931472
      %v1253 = vlog2.pop %v1228
      %v1254 = vmul.f32 %v1253, 0.6931472
      %v1255 = vlog2.pop %v1229
      %v1256 = vmul.f32 %v1255, 0.6931472
      %v1257 = vlog2.pop %v1230
      %v1258 = vmul.f32 %v1257, 0.6931472
      %v1259 = vlog2.pop %v1231
      %v1260 = vmul.f32 %v1259, 0.6931472
      %v1261 = vlog2.pop %v1232
      %v1262 = vmul.f32 %v1261, 0.6931472
      %v1263 = vlog2.pop %v1233
      %v1264 = vmul.f32 %v1263, 0.6931472
      %v1265 = vlog2.pop %v1234
      %v1266 = vmul.f32 %v1265, 0.6931472
      %v1267 = vlog2.pop %v1235
      %v1268 = vmul.f32 %v1267, 0.6931472
      %v1269 = vlog2.pop %v1236
      %v1270 = vmul.f32 %v1269, 0.6931472
      %v1271 = vmul.f32 %v1203, %v1238
      %v1272 = vmul.f32 %v1204, %v1240
      %v1273 = vmul.f32 %v1205, %v1242
      %v1274 = vmul.f32 %v1206, %v1244
      %v1275 = vmul.f32 %v1207, %v1246
      %v1276 = vmul.f32 %v1208, %v1248
      %v1277 = vmul.f32 %v1209, %v1250
      %v1278 = vmul.f32 %v1210, %v1252
      %v1279 = vmul.f32 %v1211, %v1254
      %v1280 = vmul.f32 %v1212, %v1256
      %v1281 = vmul.f32 %v1213, %v1258
      %v1282 = vmul.f32 %v1214, %v1260
      %v1283 = vmul.f32 %v1215, %v1262
      %v1284 = vmul.f32 %v1216, %v1264
      %v1285 = vmul.f32 %v1217, %v1266
      %v1286 = vmul.f32 %v1218, %v1268
      %v1287 = vmul.f32 %v1219, %v1270
      %v1288 = vsub.f32 0.0, %v1271
      %v1289 = vsub.f32 0.0, %v1272
      %v1290 = vsub.f32 0.0, %v1273
      %v1291 = vsub.f32 0.0, %v1274
      %v1292 = vsub.f32 0.0, %v1275
      %v1293 = vsub.f32 0.0, %v1276
      %v1294 = vsub.f32 0.0, %v1277
      %v1295 = vsub.f32 0.0, %v1278
      %v1296 = vsub.f32 0.0, %v1279
      %v1297 = vsub.f32 0.0, %v1280
      %v1298 = vsub.f32 0.0, %v1281
      %v1299 = vsub.f32 0.0, %v1282
      %v1300 = vsub.f32 0.0, %v1283
      %v1301 = vsub.f32 0.0, %v1284
      %v1302 = vsub.f32 0.0, %v1285
      %v1303 = vsub.f32 0.0, %v1286
      %v1304 = vsub.f32 0.0, %v1287
      %v1305 = vsel %vm778, %v1288, 0.0
      %v1306 = vsel %vm779, %v1289, 0.0
      %v1307 = vsel %vm780, %v1290, 0.0
      %v1308 = vsel %vm781, %v1291, 0.0
      %v1309 = vsel %vm782, %v1292, 0.0
      %v1310 = vsel %vm783, %v1293, 0.0
      %v1311 = vsel %vm784, %v1294, 0.0
      %v1312 = vsel %vm785, %v1295, 0.0
      %v1313 = vsel %vm786, %v1296, 0.0
      %v1314 = vsel %vm787, %v1297, 0.0
      %v1315 = vsel %vm788, %v1298, 0.0
      %v1316 = vsel %vm789, %v1299, 0.0
      %v1317 = vsel %vm790, %v1300, 0.0
      %v1318 = vsel %vm791, %v1301, 0.0
      %v1319 = vsel %vm792, %v1302, 0.0
      %v1320 = vsel %vm793, %v1303, 0.0
      %v1321 = vsel %vm794, %v1304, 0.0
      %v1322 = vadd.f32 %v761, %v1305
      %v1323 = vadd.f32 %v762, %v1306
      %v1324 = vadd.f32 %v763, %v1307
      %v1325 = vadd.f32 %v764, %v1308
      %v1326 = vadd.f32 %v765, %v1309
      %v1327 = vadd.f32 %v766, %v1310
      %v1328 = vadd.f32 %v767, %v1311
      %v1329 = vadd.f32 %v768, %v1312
      %v1330 = vadd.f32 %v769, %v1313
      %v1331 = vadd.f32 %v770, %v1314
      %v1332 = vadd.f32 %v771, %v1315
      %v1333 = vadd.f32 %v772, %v1316
      %v1334 = vadd.f32 %v773, %v1317
      %v1335 = vadd.f32 %v774, %v1318
      %v1336 = vadd.f32 %v775, %v1319
      %v1337 = vadd.f32 %v776, %v1320
      %v1338 = vadd.f32 %v777, %v1321
      %1339 = vst [vmem:[#allocation2] sm:$0xff] %v1322
      %1340 = vst [vmem:[#allocation2 + $0x8] sm:$0xff] %v1323
      %1341 = vst [vmem:[#allocation2 + $0x10] sm:$0xff] %v1324
      %1342 = vst [vmem:[#allocation2 + $0x18] sm:$0xff] %v1325
      %1343 = vst [vmem:[#allocation2 + $0x20] sm:$0xff] %v1326
      %1344 = vst [vmem:[#allocation2 + $0x28] sm:$0xff] %v1327
      %1345 = vst [vmem:[#allocation2 + $0x30] sm:$0xff] %v1328
      %1346 = vst [vmem:[#allocation2 + $0x38] sm:$0xff] %v1329
      %1347 = vst [vmem:[#allocation2 + $0x40] sm:$0xff] %v1330
      %1348 = vst [vmem:[#allocation2 + $0x48] sm:$0xff] %v1331
      %1349 = vst [vmem:[#allocation2 + $0x50] sm:$0xff] %v1332
      %1350 = vst [vmem:[#allocation2 + $0x58] sm:$0xff] %v1333
      %1351 = vst [vmem:[#allocation2 + $0x60] sm:$0xff] %v1334
      %1352 = vst [vmem:[#allocation2 + $0x68] sm:$0xff] %v1335
      %1353 = vst [vmem:[#allocation2 + $0x70] sm:$0xff] %v1336
      %1354 = vst [vmem:[#allocation2 + $0x78] sm:$0xff] %v1337
      %1355 = vst [vmem:[#allocation2 + $0x80] sm:$0xff] %v1338
    $region37: #{tpu_custom_call.1} parent=1 // pred_fallthru
      _
    // Predicated region
    $region38: #{tpu_custom_call.1} parent=1 // pred_check
      %p1356 = pneg %p96
    $region39: #{tpu_custom_call.1} parent=1 // pred_check_branch
      %1358 = sbr.rel (%p1356) target = $region41
    $region40: #{tpu_custom_call.1} parent=1 // pred_region
      %v1359 = vld [vmem:[#allocation2] sm:$0xff]
      %v1360 = vld [vmem:[#allocation2 + $0x8] sm:$0xff]
      %v1361 = vld [vmem:[#allocation2 + $0x10] sm:$0xff]
      %v1362 = vld [vmem:[#allocation2 + $0x18] sm:$0xff]
      %v1363 = vld [vmem:[#allocation2 + $0x20] sm:$0xff]
      %v1364 = vld [vmem:[#allocation2 + $0x28] sm:$0xff]
      %v1365 = vld [vmem:[#allocation2 + $0x30] sm:$0xff]
      %v1366 = vld [vmem:[#allocation2 + $0x38] sm:$0xff]
      %v1367 = vld [vmem:[#allocation2 + $0x40] sm:$0xff]
      %v1368 = vld [vmem:[#allocation2 + $0x48] sm:$0xff]
      %v1369 = vld [vmem:[#allocation2 + $0x50] sm:$0xff]
      %v1370 = vld [vmem:[#allocation2 + $0x58] sm:$0xff]
      %v1371 = vld [vmem:[#allocation2 + $0x60] sm:$0xff]
      %v1372 = vld [vmem:[#allocation2 + $0x68] sm:$0xff]
      %v1373 = vld [vmem:[#allocation2 + $0x70] sm:$0xff]
      %v1374 = vld [vmem:[#allocation2 + $0x78] sm:$0xff]
      %v1375 = vld [vmem:[#allocation2 + $0x80] sm:$0xff]
      %v1376 = vld [vmem:[#allocation8] sm:$0xff]
      %v1377 = vld [vmem:[#allocation8 + $0x8] sm:$0xff]
      %v1378 = vld [vmem:[#allocation8 + $0x10] sm:$0xff]
      %v1379 = vld [vmem:[#allocation8 + $0x18] sm:$0xff]
      %v1380 = vld [vmem:[#allocation8 + $0x20] sm:$0xff]
      %v1381 = vld [vmem:[#allocation8 + $0x28] sm:$0xff]
      %v1382 = vld [vmem:[#allocation8 + $0x30] sm:$0xff]
      %v1383 = vld [vmem:[#allocation8 + $0x38] sm:$0xff]
      %v1384 = vld [vmem:[#allocation8 + $0x40] sm:$0xff]
      %v1385 = vld [vmem:[#allocation8 + $0x48] sm:$0xff]
      %v1386 = vld [vmem:[#allocation8 + $0x50] sm:$0xff]
      %v1387 = vld [vmem:[#allocation8 + $0x58] sm:$0xff]
      %v1388 = vld [vmem:[#allocation8 + $0x60] sm:$0xff]
      %v1389 = vld [vmem:[#allocation8 + $0x68] sm:$0xff]
      %v1390 = vld [vmem:[#allocation8 + $0x70] sm:$0xff]
      %v1391 = vld [vmem:[#allocation8 + $0x78] sm:$0xff]
      %v1392 = vld [vmem:[#allocation8 + $0x80] sm:$0xff]
      %v1393 = vmul.f32 %v1359, %v1376
      %v1394 = vmul.f32 %v1360, %v1377
      %v1395 = vmul.f32 %v1361, %v1378
      %v1396 = vmul.f32 %v1362, %v1379
      %v1397 = vmul.f32 %v1363, %v1380
      %v1398 = vmul.f32 %v1364, %v1381
      %v1399 = vmul.f32 %v1365, %v1382
      %v1400 = vmul.f32 %v1366, %v1383
      %v1401 = vmul.f32 %v1367, %v1384
      %v1402 = vmul.f32 %v1368, %v1385
      %v1403 = vmul.f32 %v1369, %v1386
      %v1404 = vmul.f32 %v1370, %v1387
      %v1405 = vmul.f32 %v1371, %v1388
      %v1406 = vmul.f32 %v1372, %v1389
      %v1407 = vmul.f32 %v1373, %v1390
      %v1408 = vmul.f32 %v1374, %v1391
      %v1409 = vmul.f32 %v1375, %v1392
      %v1410 = vadd.f32 %v1393, %v1394
      %v1411 = vadd.f32 %v1410, %v1395
      %v1412 = vadd.f32 %v1411, %v1396
      %v1413 = vadd.f32 %v1412, %v1397
      %v1414 = vadd.f32 %v1413, %v1398
      %v1415 = vadd.f32 %v1414, %v1399
      %v1416 = vadd.f32 %v1415, %v1400
      %v1417 = vadd.f32 %v1416, %v1401
      %v1418 = vadd.f32 %v1417, %v1402
      %v1419 = vadd.f32 %v1418, %v1403
      %v1420 = vadd.f32 %v1419, %v1404
      %v1421 = vadd.f32 %v1420, %v1405
      %v1422 = vadd.f32 %v1421, %v1406
      %v1423 = vadd.f32 %v1422, %v1407
      %v1424 = vadd.f32 %v1423, %v1408
      %v1425 = vadd.f32 %v1424, %v1409
      %1426 = vadd.xlane.f32.xlu0 %v1425
      %v1427 = vpop.xlane.xlu0 %1426
      %v1428 = vrot.slane %v1427, 4
      %v1429 = vadd.f32 %v1427, %v1428
      %v1430 = vrot.slane %v1429, 2
      %v1431 = vadd.f32 %v1429, %v1430
      %v1432 = vrot.slane %v1431, 1
      %v1433 = vadd.f32 %v1431, %v1432
      %s1434 = vtos %v1433
      %s1435 = smul.f32 %s1434, 0.00022977941
      %s1436 = scalar_lea.smem [#allocation9], 0
      %1437 = sst [smem:[%s1436]] %s1435
    $region41: #{tpu_custom_call.1} parent=1 // pred_fallthru
      _
    // Predicated region
    $region42: #{tpu_custom_call.1} parent=1 // pred_check
      _
    $region43: #{tpu_custom_call.1} parent=1 // pred_check_branch
      %1439 = sbr.rel (0) target = $region45
    $region44: #{tpu_custom_call.1} parent=1 // pred_region
      %1441 = vsyncadd [#allocation5], 0
      %s1443 = sshll.u32 %s3, 4
      %s1444 = int_to_ptr.hbm [resolvable:$true] %s1443
      %1446 = dma.smem_to_hbm [#allocation9], 16, %s1444, [#allocation5]
    $region45: #{tpu_custom_call.1} parent=1 // pred_fallthru
      _
    // Predicated region
    $region46: #{tpu_custom_call.1} parent=1 // pred_check
      _
    $region47: #{tpu_custom_call.1} parent=1 // pred_check_branch
      %1448 = sbr.rel (0) target = $region49
    $region48: #{tpu_custom_call.1} parent=1 // pred_region
      %1450 = dma.done [#allocation5], 16
    $region49: #{tpu_custom_call.1} parent=1 // pred_fallthru
      _
    %1451 = sfence
    %1452 = vsyncpa [#allocation4], 1
    %1453 = vsyncpa [#allocation7], 1
    %1454 = vsyncpa [#allocation5], 1

</llo_original>
